<compile_context>
chip_gen: v6e
topology: v6e:2x2x1
jax: 0.10.0
libtpu: 0.0.40
codegen_flags: <defaults>
</compile_context>

<pallas_src>
import jax
import jax.numpy as jnp
from jax.experimental import pallas as pl
from jax.experimental.pallas import tpu as pltpu


def _round_up(n: int, m: int = 8) -> int:
    return ((n + m - 1) // m) * m


def _layer_slab_layout(input_size: int, hidden: int, num_layers: int):
    """Row offsets (8-row aligned) and total rows of the packed layer-weight slab.

    Block order: [w_ih0 (in,H), w_hh0 (H,H), b0 (1,H)] then for each layer l>=1:
                 [w_ih_l (H,H), w_hh_l (H,H), b_l (1,H)].
    """
    blocks = [input_size, hidden, 1]
    for _ in range(1, num_layers):
        blocks += [hidden, hidden, 1]
    offs, r = [], 0
    for nrows in blocks:
        offs.append(r)
        r += _round_up(nrows, 8)
    return offs, r


def pack_params(params, num_layers):
    """One-time host-side weight prep: pre-add biases and pack into two f32 slabs."""
    w_ih0, b_ih0, w_hh0, b_hh0 = params["layers"][0]
    input_size, hidden = w_ih0.shape
    offs, total_rows = _layer_slab_layout(input_size, hidden, num_layers)

    pieces = [w_ih0, w_hh0, b_ih0 + b_hh0]
    for l in range(1, num_layers):
        w_ih, b_ih, w_hh, b_hh = params["layers"][l]
        pieces += [w_ih, w_hh, b_ih + b_hh]

    wslab = jnp.zeros((total_rows, hidden), jnp.float32)
    for off, p in zip(offs, pieces):
        wslab = wslab.at[off:off + p.shape[0], :].set(p.astype(jnp.float32))

    w_fc, b_fc = params["w_fc"], params["b_fc"]
    n_category = w_fc.shape[1]
    h_al = _round_up(hidden, 8)
    fcslab = jnp.zeros((h_al + 8, n_category), jnp.float32)
    fcslab = fcslab.at[:hidden, :].set(w_fc.astype(jnp.float32))
    fcslab = fcslab.at[h_al:h_al + 1, :].set(b_fc.astype(jnp.float32))
    return wslab, fcslab


def _make_rnn_kernel(num_layers: int, input_size: int, hidden: int,
                     n_category: int, seq_len: int):
    offs, _ = _layer_slab_layout(input_size, hidden, num_layers)
    h_al = _round_up(hidden, 8)

    def kernel(x_ref, w_ref, fc_ref, out_ref):
        # --- static-offset unpack of the packed layer-weight slab (8-row aligned) ---
        w_ih0 = w_ref[offs[0]:offs[0] + input_size, :]          # (in, H)
        w_hh0 = w_ref[offs[1]:offs[1] + hidden, :]              # (H, H)
        b0 = w_ref[offs[2]:offs[2] + 1, :]                      # (1, H) = b_ih0 + b_hh0
        layer_w = []
        for l in range(1, num_layers):
            base = 3 + 3 * (l - 1)
            w_ih = w_ref[offs[base]:offs[base] + hidden, :]     # (H, H)
            w_hh = w_ref[offs[base + 1]:offs[base + 1] + hidden, :]
            b = w_ref[offs[base + 2]:offs[base + 2] + 1, :]     # (1, H) pre-added
            layer_w.append((w_ih, w_hh, b))

        # --- off-critical-path precompute: layer-0 input projection for all timesteps ---
        xw0 = jnp.dot(x_ref[...], w_ih0, preferred_element_type=jnp.float32) + b0

        # Initial hidden state: zeros, one (1, H) slab per layer (batch fixed to 1).
        h = [jnp.zeros((1, hidden), jnp.float32) for _ in range(num_layers)]

        # --- fully-unrolled recurrence (seq_len static & small) ---
        # No lane concat; the two dots per layer are independent and the unrolled DAG
        # lets the scheduler wavefront layer l(t) against layer 0(t+1).
        for t in range(seq_len):
            h[0] = jnp.tanh(
                xw0[t:t + 1, :]
                + jnp.dot(h[0], w_hh0, preferred_element_type=jnp.float32))
            for l in range(1, num_layers):
                w_ih, w_hh, b = layer_w[l - 1]
                h[l] = jnp.tanh(
                    jnp.dot(h[l - 1], w_ih, preferred_element_type=jnp.float32)
                    + jnp.dot(h[l], w_hh, preferred_element_type=jnp.float32)
                    + b)

        # --- fc + log-softmax; fc weights loaded at use site (after the recurrence) ---
        w_fc = fc_ref[0:hidden, :]                              # (H, C)
        b_fc = fc_ref[h_al:h_al + 1, :]                         # (1, C)
        logits = jnp.dot(h[num_layers - 1], w_fc,
                         preferred_element_type=jnp.float32) + b_fc
        m = jnp.max(logits, axis=1, keepdims=True)
        z = logits - m
        lse = jnp.log(jnp.sum(jnp.exp(z), axis=1, keepdims=True))
        out_ref[...] = z - lse

    return kernel


def rnn_forward(x, packed, num_layers, input_size, hidden, n_category):
    """x: (seq_len, 1, input_size) f32; packed = pack_params(...). Returns (1, C) log-probs."""
    seq_len, batch, in_sz = x.shape
    assert batch == 1, "module semantics fix batch size to 1 (hidden init uses batch=1)"
    assert in_sz == input_size
    x2d = x[:, 0, :]
    wslab, fcslab = packed

    kernel = _make_rnn_kernel(num_layers, input_size, hidden, n_category, seq_len)

    # Whole arrays resident in VMEM (total footprint << 1 MiB); full-array BlockSpecs
    # exempt the narrow (32 / 8)-lane shapes from the (8,128) block constraint.
    out = pl.pallas_call(
        kernel,
        out_shape=jax.ShapeDtypeStruct((1, n_category), jnp.float32),
        in_specs=[pl.BlockSpec(memory_space=pltpu.MemorySpace.VMEM)] * 3,
        out_specs=pl.BlockSpec(memory_space=pltpu.MemorySpace.VMEM),
    )(x2d, wslab, fcslab)
    return out


def init_params(key, input_size, hidden_size, num_layers, n_category):
    """Deterministic init mimicking PyTorch's uniform(-1/sqrt(H), 1/sqrt(H)).

    Weight matrices are stored pre-transposed ((in, out)) so the kernel computes row @ W.
    """
    bound = 1.0 / jnp.sqrt(jnp.float32(hidden_size))
    layers = []
    for l in range(num_layers):
        in_dim = input_size if l == 0 else hidden_size
        key, k1, k2, k3, k4 = jax.random.split(key, 5)
        w_ih = jax.random.uniform(k1, (in_dim, hidden_size), jnp.float32, -bound, bound)
        b_ih = jax.random.uniform(k2, (1, hidden_size), jnp.float32, -bound, bound)
        w_hh = jax.random.uniform(k3, (hidden_size, hidden_size), jnp.float32, -bound, bound)
        b_hh = jax.random.uniform(k4, (1, hidden_size), jnp.float32, -bound, bound)
        layers.append((w_ih, b_ih, w_hh, b_hh))
    key, k5, k6 = jax.random.split(key, 3)
    w_fc = jax.random.uniform(k5, (hidden_size, n_category), jnp.float32, -bound, bound)
    b_fc = jax.random.uniform(k6, (1, n_category), jnp.float32, -bound, bound)
    return {"layers": layers, "w_fc": w_fc, "b_fc": b_fc}


def rnn_reference(x, params, num_layers):
    """Pure-JAX reference of the PyTorch forward (for correctness checking)."""
    x2d = x[:, 0, :]
    hidden_size = params["layers"][0][2].shape[0]
    h = [jnp.zeros((1, hidden_size), jnp.float32) for _ in range(num_layers)]
    for t in range(x2d.shape[0]):
        layer_in = x2d[t:t + 1, :]
        for l in range(num_layers):
            w_ih, b_ih, w_hh, b_hh = params["layers"][l]
            h[l] = jnp.tanh(layer_in @ w_ih + b_ih + h[l] @ w_hh + b_hh)
            layer_in = h[l]
    logits = h[-1] @ params["w_fc"] + params["b_fc"]
    return jax.nn.log_softmax(logits, axis=1)


if __name__ == "__main__":
    seq_len = 8
    input_size = 32
    hidden_size = 32
    num_layers = 2
    n_category = 8

    key = jax.random.PRNGKey(0)
    key, kx, kp = jax.random.split(key, 3)
    x = jax.random.normal(kx, (seq_len, 1, input_size), jnp.float32)
    params = init_params(kp, input_size, hidden_size, num_layers, n_category)

    # One-time weight prep (done at "model load", not per forward call).
    packed = pack_params(params, num_layers)

    out = rnn_forward(x, packed, num_layers, input_size, hidden_size, n_category)
    out = jax.block_until_ready(out)

    ref = rnn_reference(x, params, num_layers)
    assert out.shape == (1, n_category)
    assert bool(jnp.all(jnp.isfinite(out)))
    assert bool(jnp.allclose(out, ref, rtol=1e-4, atol=1e-4))

    print("KERNEL_OK")
</pallas_src>

<mosaic_0001>
module attributes {stable_mosaic.version = 11 : i64} {
  func.func @kernel(%arg0: memref<8x32xf32, #tpu.memory_space<vmem>>, %arg1: memref<144x32xf32, #tpu.memory_space<vmem>>, %arg2: memref<40x8xf32, #tpu.memory_space<vmem>>, %arg3: memref<1x8xf32, #tpu.memory_space<vmem>>) attributes {dimension_semantics = [], scalar_prefetch = 0 : i64, scratch_operands = 0 : i64, tpu.core_type = #tpu.core_type<tc>} {
    %c0 = arith.constant 0 : index
    %c0_0 = arith.constant 0 : index
    %0 = vector.load %arg1[%c0, %c0_0] : memref<144x32xf32, #tpu.memory_space<vmem>>, vector<32x32xf32>
    %c32 = arith.constant 32 : index
    %c0_1 = arith.constant 0 : index
    %1 = vector.load %arg1[%c32, %c0_1] : memref<144x32xf32, #tpu.memory_space<vmem>>, vector<32x32xf32>
    %c64 = arith.constant 64 : index
    %c0_2 = arith.constant 0 : index
    %2 = vector.load %arg1[%c64, %c0_2] : memref<144x32xf32, #tpu.memory_space<vmem>>, vector<1x32xf32>
    %c72 = arith.constant 72 : index
    %c0_3 = arith.constant 0 : index
    %3 = vector.load %arg1[%c72, %c0_3] : memref<144x32xf32, #tpu.memory_space<vmem>>, vector<32x32xf32>
    %c104 = arith.constant 104 : index
    %c0_4 = arith.constant 0 : index
    %4 = vector.load %arg1[%c104, %c0_4] : memref<144x32xf32, #tpu.memory_space<vmem>>, vector<32x32xf32>
    %c136 = arith.constant 136 : index
    %c0_5 = arith.constant 0 : index
    %5 = vector.load %arg1[%c136, %c0_5] : memref<144x32xf32, #tpu.memory_space<vmem>>, vector<1x32xf32>
    %c0_6 = arith.constant 0 : index
    %c0_7 = arith.constant 0 : index
    %6 = vector.load %arg0[%c0_6, %c0_7] : memref<8x32xf32, #tpu.memory_space<vmem>>, vector<8x32xf32>
    %cst = arith.constant dense<0.000000e+00> : vector<8x32xf32>
    %7 = tpu.matmul %6, %0, %cst {dimension_numbers = #tpu.dot_dimension_numbers<[1], [0], [0], [1], [0, 0, 1, 1], [], []>} : vector<8x32xf32>, vector<32x32xf32>, vector<8x32xf32> -> vector<8x32xf32>
    %8 = vector.broadcast %2 : vector<1x32xf32> to vector<8x32xf32>
    %9 = arith.addf %7, %8 : vector<8x32xf32>
    %cst_8 = arith.constant 0.000000e+00 : f32
    %10 = vector.broadcast %cst_8 : f32 to vector<1x32xf32>
    %cst_9 = arith.constant 0.000000e+00 : f32
    %11 = vector.broadcast %cst_9 : f32 to vector<1x32xf32>
    %12 = vector.extract_strided_slice %9 {offsets = [0, 0], sizes = [1, 32], strides = [1, 1]} : vector<8x32xf32> to vector<1x32xf32>
    %cst_10 = arith.constant dense<0.000000e+00> : vector<1x32xf32>
    %13 = tpu.matmul %10, %1, %cst_10 {dimension_numbers = #tpu.dot_dimension_numbers<[1], [0], [0], [1], [0, 0, 1, 1], [], []>} : vector<1x32xf32>, vector<32x32xf32>, vector<1x32xf32> -> vector<1x32xf32>
    %14 = arith.addf %12, %13 : vector<1x32xf32>
    %15 = math.tanh %14 : vector<1x32xf32>
    %cst_11 = arith.constant dense<0.000000e+00> : vector<1x32xf32>
    %16 = tpu.matmul %15, %3, %cst_11 {dimension_numbers = #tpu.dot_dimension_numbers<[1], [0], [0], [1], [0, 0, 1, 1], [], []>} : vector<1x32xf32>, vector<32x32xf32>, vector<1x32xf32> -> vector<1x32xf32>
    %cst_12 = arith.constant dense<0.000000e+00> : vector<1x32xf32>
    %17 = tpu.matmul %11, %4, %cst_12 {dimension_numbers = #tpu.dot_dimension_numbers<[1], [0], [0], [1], [0, 0, 1, 1], [], []>} : vector<1x32xf32>, vector<32x32xf32>, vector<1x32xf32> -> vector<1x32xf32>
    %18 = arith.addf %16, %17 : vector<1x32xf32>
    %19 = arith.addf %18, %5 : vector<1x32xf32>
    %20 = math.tanh %19 : vector<1x32xf32>
    %21 = vector.extract_strided_slice %9 {offsets = [1, 0], sizes = [1, 32], strides = [1, 1]} : vector<8x32xf32> to vector<1x32xf32>
    %cst_13 = arith.constant dense<0.000000e+00> : vector<1x32xf32>
    %22 = tpu.matmul %15, %1, %cst_13 {dimension_numbers = #tpu.dot_dimension_numbers<[1], [0], [0], [1], [0, 0, 1, 1], [], []>} : vector<1x32xf32>, vector<32x32xf32>, vector<1x32xf32> -> vector<1x32xf32>
    %23 = arith.addf %21, %22 : vector<1x32xf32>
    %24 = math.tanh %23 : vector<1x32xf32>
    %cst_14 = arith.constant dense<0.000000e+00> : vector<1x32xf32>
    %25 = tpu.matmul %24, %3, %cst_14 {dimension_numbers = #tpu.dot_dimension_numbers<[1], [0], [0], [1], [0, 0, 1, 1], [], []>} : vector<1x32xf32>, vector<32x32xf32>, vector<1x32xf32> -> vector<1x32xf32>
    %cst_15 = arith.constant dense<0.000000e+00> : vector<1x32xf32>
    %26 = tpu.matmul %20, %4, %cst_15 {dimension_numbers = #tpu.dot_dimension_numbers<[1], [0], [0], [1], [0, 0, 1, 1], [], []>} : vector<1x32xf32>, vector<32x32xf32>, vector<1x32xf32> -> vector<1x32xf32>
    %27 = arith.addf %25, %26 : vector<1x32xf32>
    %28 = arith.addf %27, %5 : vector<1x32xf32>
    %29 = math.tanh %28 : vector<1x32xf32>
    %30 = vector.extract_strided_slice %9 {offsets = [2, 0], sizes = [1, 32], strides = [1, 1]} : vector<8x32xf32> to vector<1x32xf32>
    %cst_16 = arith.constant dense<0.000000e+00> : vector<1x32xf32>
    %31 = tpu.matmul %24, %1, %cst_16 {dimension_numbers = #tpu.dot_dimension_numbers<[1], [0], [0], [1], [0, 0, 1, 1], [], []>} : vector<1x32xf32>, vector<32x32xf32>, vector<1x32xf32> -> vector<1x32xf32>
    %32 = arith.addf %30, %31 : vector<1x32xf32>
    %33 = math.tanh %32 : vector<1x32xf32>
    %cst_17 = arith.constant dense<0.000000e+00> : vector<1x32xf32>
    %34 = tpu.matmul %33, %3, %cst_17 {dimension_numbers = #tpu.dot_dimension_numbers<[1], [0], [0], [1], [0, 0, 1, 1], [], []>} : vector<1x32xf32>, vector<32x32xf32>, vector<1x32xf32> -> vector<1x32xf32>
    %cst_18 = arith.constant dense<0.000000e+00> : vector<1x32xf32>
    %35 = tpu.matmul %29, %4, %cst_18 {dimension_numbers = #tpu.dot_dimension_numbers<[1], [0], [0], [1], [0, 0, 1, 1], [], []>} : vector<1x32xf32>, vector<32x32xf32>, vector<1x32xf32> -> vector<1x32xf32>
    %36 = arith.addf %34, %35 : vector<1x32xf32>
    %37 = arith.addf %36, %5 : vector<1x32xf32>
    %38 = math.tanh %37 : vector<1x32xf32>
    %39 = vector.extract_strided_slice %9 {offsets = [3, 0], sizes = [1, 32], strides = [1, 1]} : vector<8x32xf32> to vector<1x32xf32>
    %cst_19 = arith.constant dense<0.000000e+00> : vector<1x32xf32>
    %40 = tpu.matmul %33, %1, %cst_19 {dimension_numbers = #tpu.dot_dimension_numbers<[1], [0], [0], [1], [0, 0, 1, 1], [], []>} : vector<1x32xf32>, vector<32x32xf32>, vector<1x32xf32> -> vector<1x32xf32>
    %41 = arith.addf %39, %40 : vector<1x32xf32>
    %42 = math.tanh %41 : vector<1x32xf32>
    %cst_20 = arith.constant dense<0.000000e+00> : vector<1x32xf32>
    %43 = tpu.matmul %42, %3, %cst_20 {dimension_numbers = #tpu.dot_dimension_numbers<[1], [0], [0], [1], [0, 0, 1, 1], [], []>} : vector<1x32xf32>, vector<32x32xf32>, vector<1x32xf32> -> vector<1x32xf32>
    %cst_21 = arith.constant dense<0.000000e+00> : vector<1x32xf32>
    %44 = tpu.matmul %38, %4, %cst_21 {dimension_numbers = #tpu.dot_dimension_numbers<[1], [0], [0], [1], [0, 0, 1, 1], [], []>} : vector<1x32xf32>, vector<32x32xf32>, vector<1x32xf32> -> vector<1x32xf32>
    %45 = arith.addf %43, %44 : vector<1x32xf32>
    %46 = arith.addf %45, %5 : vector<1x32xf32>
    %47 = math.tanh %46 : vector<1x32xf32>
    %48 = vector.extract_strided_slice %9 {offsets = [4, 0], sizes = [1, 32], strides = [1, 1]} : vector<8x32xf32> to vector<1x32xf32>
    %cst_22 = arith.constant dense<0.000000e+00> : vector<1x32xf32>
    %49 = tpu.matmul %42, %1, %cst_22 {dimension_numbers = #tpu.dot_dimension_numbers<[1], [0], [0], [1], [0, 0, 1, 1], [], []>} : vector<1x32xf32>, vector<32x32xf32>, vector<1x32xf32> -> vector<1x32xf32>
    %50 = arith.addf %48, %49 : vector<1x32xf32>
    %51 = math.tanh %50 : vector<1x32xf32>
    %cst_23 = arith.constant dense<0.000000e+00> : vector<1x32xf32>
    %52 = tpu.matmul %51, %3, %cst_23 {dimension_numbers = #tpu.dot_dimension_numbers<[1], [0], [0], [1], [0, 0, 1, 1], [], []>} : vector<1x32xf32>, vector<32x32xf32>, vector<1x32xf32> -> vector<1x32xf32>
    %cst_24 = arith.constant dense<0.000000e+00> : vector<1x32xf32>
    %53 = tpu.matmul %47, %4, %cst_24 {dimension_numbers = #tpu.dot_dimension_numbers<[1], [0], [0], [1], [0, 0, 1, 1], [], []>} : vector<1x32xf32>, vector<32x32xf32>, vector<1x32xf32> -> vector<1x32xf32>
    %54 = arith.addf %52, %53 : vector<1x32xf32>
    %55 = arith.addf %54, %5 : vector<1x32xf32>
    %56 = math.tanh %55 : vector<1x32xf32>
    %57 = vector.extract_strided_slice %9 {offsets = [5, 0], sizes = [1, 32], strides = [1, 1]} : vector<8x32xf32> to vector<1x32xf32>
    %cst_25 = arith.constant dense<0.000000e+00> : vector<1x32xf32>
    %58 = tpu.matmul %51, %1, %cst_25 {dimension_numbers = #tpu.dot_dimension_numbers<[1], [0], [0], [1], [0, 0, 1, 1], [], []>} : vector<1x32xf32>, vector<32x32xf32>, vector<1x32xf32> -> vector<1x32xf32>
    %59 = arith.addf %57, %58 : vector<1x32xf32>
    %60 = math.tanh %59 : vector<1x32xf32>
    %cst_26 = arith.constant dense<0.000000e+00> : vector<1x32xf32>
    %61 = tpu.matmul %60, %3, %cst_26 {dimension_numbers = #tpu.dot_dimension_numbers<[1], [0], [0], [1], [0, 0, 1, 1], [], []>} : vector<1x32xf32>, vector<32x32xf32>, vector<1x32xf32> -> vector<1x32xf32>
    %cst_27 = arith.constant dense<0.000000e+00> : vector<1x32xf32>
    %62 = tpu.matmul %56, %4, %cst_27 {dimension_numbers = #tpu.dot_dimension_numbers<[1], [0], [0], [1], [0, 0, 1, 1], [], []>} : vector<1x32xf32>, vector<32x32xf32>, vector<1x32xf32> -> vector<1x32xf32>
    %63 = arith.addf %61, %62 : vector<1x32xf32>
    %64 = arith.addf %63, %5 : vector<1x32xf32>
    %65 = math.tanh %64 : vector<1x32xf32>
    %66 = vector.extract_strided_slice %9 {offsets = [6, 0], sizes = [1, 32], strides = [1, 1]} : vector<8x32xf32> to vector<1x32xf32>
    %cst_28 = arith.constant dense<0.000000e+00> : vector<1x32xf32>
    %67 = tpu.matmul %60, %1, %cst_28 {dimension_numbers = #tpu.dot_dimension_numbers<[1], [0], [0], [1], [0, 0, 1, 1], [], []>} : vector<1x32xf32>, vector<32x32xf32>, vector<1x32xf32> -> vector<1x32xf32>
    %68 = arith.addf %66, %67 : vector<1x32xf32>
    %69 = math.tanh %68 : vector<1x32xf32>
    %cst_29 = arith.constant dense<0.000000e+00> : vector<1x32xf32>
    %70 = tpu.matmul %69, %3, %cst_29 {dimension_numbers = #tpu.dot_dimension_numbers<[1], [0], [0], [1], [0, 0, 1, 1], [], []>} : vector<1x32xf32>, vector<32x32xf32>, vector<1x32xf32> -> vector<1x32xf32>
    %cst_30 = arith.constant dense<0.000000e+00> : vector<1x32xf32>
    %71 = tpu.matmul %65, %4, %cst_30 {dimension_numbers = #tpu.dot_dimension_numbers<[1], [0], [0], [1], [0, 0, 1, 1], [], []>} : vector<1x32xf32>, vector<32x32xf32>, vector<1x32xf32> -> vector<1x32xf32>
    %72 = arith.addf %70, %71 : vector<1x32xf32>
    %73 = arith.addf %72, %5 : vector<1x32xf32>
    %74 = math.tanh %73 : vector<1x32xf32>
    %75 = vector.extract_strided_slice %9 {offsets = [7, 0], sizes = [1, 32], strides = [1, 1]} : vector<8x32xf32> to vector<1x32xf32>
    %cst_31 = arith.constant dense<0.000000e+00> : vector<1x32xf32>
    %76 = tpu.matmul %69, %1, %cst_31 {dimension_numbers = #tpu.dot_dimension_numbers<[1], [0], [0], [1], [0, 0, 1, 1], [], []>} : vector<1x32xf32>, vector<32x32xf32>, vector<1x32xf32> -> vector<1x32xf32>
    %77 = arith.addf %75, %76 : vector<1x32xf32>
    %78 = math.tanh %77 : vector<1x32xf32>
    %cst_32 = arith.constant dense<0.000000e+00> : vector<1x32xf32>
    %79 = tpu.matmul %78, %3, %cst_32 {dimension_numbers = #tpu.dot_dimension_numbers<[1], [0], [0], [1], [0, 0, 1, 1], [], []>} : vector<1x32xf32>, vector<32x32xf32>, vector<1x32xf32> -> vector<1x32xf32>
    %cst_33 = arith.constant dense<0.000000e+00> : vector<1x32xf32>
    %80 = tpu.matmul %74, %4, %cst_33 {dimension_numbers = #tpu.dot_dimension_numbers<[1], [0], [0], [1], [0, 0, 1, 1], [], []>} : vector<1x32xf32>, vector<32x32xf32>, vector<1x32xf32> -> vector<1x32xf32>
    %81 = arith.addf %79, %80 : vector<1x32xf32>
    %82 = arith.addf %81, %5 : vector<1x32xf32>
    %83 = math.tanh %82 : vector<1x32xf32>
    %c0_34 = arith.constant 0 : index
    %c0_35 = arith.constant 0 : index
    %84 = vector.load %arg2[%c0_34, %c0_35] : memref<40x8xf32, #tpu.memory_space<vmem>>, vector<32x8xf32>
    %c32_36 = arith.constant 32 : index
    %c0_37 = arith.constant 0 : index
    %85 = vector.load %arg2[%c32_36, %c0_37] : memref<40x8xf32, #tpu.memory_space<vmem>>, vector<1x8xf32>
    %cst_38 = arith.constant dense<0.000000e+00> : vector<1x8xf32>
    %86 = tpu.matmul %83, %84, %cst_38 {dimension_numbers = #tpu.dot_dimension_numbers<[1], [0], [0], [1], [0, 0, 1, 1], [], []>} : vector<1x32xf32>, vector<32x8xf32>, vector<1x8xf32> -> vector<1x8xf32>
    %87 = arith.addf %86, %85 : vector<1x8xf32>
    %cst_39 = arith.constant dense<0xFF800000> : vector<1xf32>
    %88 = vector.multi_reduction <maximumf>, %87, %cst_39 [1] : vector<1x8xf32> to vector<1xf32>
    %89 = vector.shape_cast %88 : vector<1xf32> to vector<1x1xf32>
    %90 = vector.broadcast %89 : vector<1x1xf32> to vector<1x8xf32>
    %91 = arith.subf %87, %90 : vector<1x8xf32>
    %92 = math.exp %91 : vector<1x8xf32>
    %cst_40 = arith.constant dense<0.000000e+00> : vector<1xf32>
    %93 = vector.multi_reduction <add>, %92, %cst_40 [1] : vector<1x8xf32> to vector<1xf32>
    %94 = vector.shape_cast %93 : vector<1xf32> to vector<1x1xf32>
    %95 = math.log %94 : vector<1x1xf32>
    %96 = vector.broadcast %95 : vector<1x1xf32> to vector<1x8xf32>
    %97 = arith.subf %91, %96 : vector<1x8xf32>
    %c0_41 = arith.constant 0 : index
    %c0_42 = arith.constant 0 : index
    %98 = vector.load %arg3[%c0_41, %c0_42] : memref<1x8xf32, #tpu.memory_space<vmem>>, vector<1x8xf32>
    tpu.vector_store %arg3[%c0_41, %c0_42], %97 {strides = array<i32>} : memref<1x8xf32, #tpu.memory_space<vmem>>, vector<1x8xf32>,
    return
  }
}

</mosaic_0001>

<llo_original>
// kernel: tpu_custom_call.1
$region0: #{tpu_custom_call.1}
  #allocation0 [shape = 'u32[]', space=smem, size = 0x4, offset = 0x4, fixed_abs, tag = 'smem constant byte address 0x4 - core index']
  #allocation1 [shape = 'u32[144,128]{1,0:T(1,128)}', space=vmem, size = 0x12000, scoped, tag = 'internal scratch']
  %s0 = inlined_call_operand.vmem [shape: f32[8,32], index: 0, kind: input, shape index: {}]
  %s1 = inlined_call_operand.vmem [shape: f32[144,32], index: 1, kind: input, shape index: {}]
  %s2 = inlined_call_operand.vmem [shape: f32[40,8], index: 2, kind: input, shape index: {}]
  %s3 = inlined_call_operand.hbm [shape: f32[1,8], index: 3, kind: output, shape index: {}]
  %s4 = sld [smem:[#allocation0]]
  $region22: #{tpu_custom_call.1} parent=0
    _
  %s6 = ssub.s32 1, %s4
  %s7 = scalar_select 0, %s6, %s4
  $region1: #{tpu_custom_call.1} parent=0
    #allocation2 [shape = 'u8[512]{0}', space=vmem, size = 0x400, scoped, tag = 'output window, operand 0, single buffered']
    #allocation3 [shape = 's32[1]{0}', space=sflag, size = 0x4, scoped, tag = 'scoped memory for tpu_custom_call.1']
    %8 = vsyncpa [#allocation3], 0
    // Predicated region
    $region2: #{tpu_custom_call.1} parent=1 // pred_check
      _
    $region3: #{tpu_custom_call.1} parent=1 // pred_check_branch
      %10 = sbr.rel (0) target = $region5
    $region4: #{tpu_custom_call.1} parent=1 // pred_region
      _
    $region5: #{tpu_custom_call.1} parent=1 // pred_fallthru
      _
    // Predicated region
    $region6: #{tpu_custom_call.1} parent=1 // pred_check
      _
    $region7: #{tpu_custom_call.1} parent=1 // pred_check_branch
      %12 = sbr.rel (0) target = $region9
    $region8: #{tpu_custom_call.1} parent=1 // pred_region
      _
    $region9: #{tpu_custom_call.1} parent=1 // pred_fallthru
      _
    // Predicated region
    $region10: #{tpu_custom_call.1} parent=1 // pred_check
      _
    $region11: #{tpu_custom_call.1} parent=1 // pred_check_branch
      %14 = sbr.rel (0) target = $region13
    $region12: #{tpu_custom_call.1} parent=1 // pred_region
      _
    $region13: #{tpu_custom_call.1} parent=1 // pred_fallthru
      _
    %v15 = vld [vmem:[%s1] sm:$0xff]
    %v16 = vld [vmem:[%s1 + $0x8] sm:$0xff]
    %v17 = vld [vmem:[%s1 + $0x10] sm:$0xff]
    %v18 = vld [vmem:[%s1 + $0x18] sm:$0xff]
    %v19 = vld [vmem:[%s1 + $0x20] sm:$0xff]
    %v20 = vld [vmem:[%s1 + $0x28] sm:$0xff]
    %v21 = vld [vmem:[%s1 + $0x30] sm:$0xff]
    %v22 = vld [vmem:[%s1 + $0x38] sm:$0xff]
    %v23 = vld [vmem:[%s1 + $0x40] sm:$0x1]
    %v24 = vld [vmem:[%s1 + $0x48] sm:$0xff]
    %v25 = vld [vmem:[%s1 + $0x50] sm:$0xff]
    %v26 = vld [vmem:[%s1 + $0x58] sm:$0xff]
    %v27 = vld [vmem:[%s1 + $0x60] sm:$0xff]
    %v28 = vld [vmem:[%s1 + $0x68] sm:$0xff]
    %v29 = vld [vmem:[%s1 + $0x70] sm:$0xff]
    %v30 = vld [vmem:[%s1 + $0x78] sm:$0xff]
    %v31 = vld [vmem:[%s1 + $0x80] sm:$0xff]
    %v32 = vld [vmem:[%s1 + $0x88] sm:$0x1]
    %v33 = vld [vmem:[%s0] sm:$0xff]
    %v34 = vlaneseq
    %v35 = vshrl.u32 %v34, 7
    %v36 = vsub.s32 0, %v35
    %v37 = vrot.slane %v23, %v36
    %vm38 = vcmask 261120
    %v40 = vsel %vm38, %v33, 0
    %42 = vmatprep.subr.mxu0 0.0
    %43 = vmatpush1.msra.mxu0 0.0
    %44 = vmatprep.subr.mxu0 0.0
    %45 = vmatpush1.msra.mxu0 0.0
    %46 = vmatprep.subr.mxu0 0.0
    %47 = vmatpush1.msra.mxu0 0.0
    %48 = vmatprep.subr.mxu0 0.0
    %49 = vmatpush1.msra.mxu0 0.0
    %50 = vmatprep.subr.mxu0 0.0
    %51 = vmatpush1.msra.mxu0 0.0
    %52 = vmatprep.subr.mxu0 0.0
    %53 = vmatpush1.msra.mxu0 0.0
    %54 = vmatprep.subr.mxu0 0.0
    %55 = vmatpush1.msra.mxu0 0.0
    %56 = vmatprep.subr.mxu0 0.0
    %57 = vmatpush1.msra.mxu0 0.0
    %58 = vmatprep.subr.mxu0 0.0
    %59 = vmatpush1.msra.mxu0 0.0
    %60 = vmatprep.subr.mxu0 0.0
    %61 = vmatpush1.msra.mxu0 0.0
    %62 = vmatprep.subr.mxu0 0.0
    %63 = vmatpush1.msra.mxu0 0.0
    %64 = vmatprep.subr.mxu0 0.0
    %65 = vmatpush1.msra.mxu0 0.0
    %66 = vmatprep.subr.mxu0 0.0
    %67 = vmatpush1.msra.mxu0 %v18
    %68 = vmatprep.subr.mxu0 0.0
    %69 = vmatpush1.msra.mxu0 %v17
    %70 = vmatprep.subr.mxu0 0.0
    %71 = vmatpush1.msra.mxu0 %v16
    %72 = vmatprep.subr.mxu0 0.0
    %73 = vmatpush1.msra.mxu0 %v15
    %74 = vmatprep.subr.mxu0 0.0
    %75 = vmatpush2.msra.mxu0 0.0
    %76 = vmatprep.subr.mxu0 0.0
    %77 = vmatpush2.msra.mxu0 0.0
    %78 = vmatprep.subr.mxu0 0.0
    %79 = vmatpush2.msra.mxu0 0.0
    %80 = vmatprep.subr.mxu0 0.0
    %81 = vmatpush2.msra.mxu0 0.0
    %82 = vmatprep.subr.mxu0 0.0
    %83 = vmatpush2.msra.mxu0 0.0
    %84 = vmatprep.subr.mxu0 0.0
    %85 = vmatpush2.msra.mxu0 0.0
    %86 = vmatprep.subr.mxu0 0.0
    %87 = vmatpush2.msra.mxu0 0.0
    %88 = vmatprep.subr.mxu0 0.0
    %89 = vmatpush2.msra.mxu0 0.0
    %90 = vmatprep.subr.mxu0 0.0
    %91 = vmatpush2.msra.mxu0 0.0
    %92 = vmatprep.subr.mxu0 0.0
    %93 = vmatpush2.msra.mxu0 0.0
    %94 = vmatprep.subr.mxu0 0.0
    %95 = vmatpush2.msra.mxu0 0.0
    %96 = vmatprep.subr.mxu0 0.0
    %97 = vmatpush2.msra.mxu0 0.0
    %98 = vmatprep.subr.mxu0 0.0
    %99 = vmatpush2.msra.mxu0 0.0
    %100 = vmatprep.subr.mxu0 0.0
    %101 = vmatpush2.msra.mxu0 0.0
    %102 = vmatprep.subr.mxu0 0.0
    %103 = vmatpush2.msra.mxu0 0.0
    %104 = vmatprep.subr.mxu0 0.0
    %105 = vmatpush2.msra.mxu0 0.0
    %106 = vmatprep.mubr.f32.mxu0 0.0
    %107 = vmatmul.mubr.f32.gmra.mxu0 %v40
    %v108 = vpop.f32.mrf.mxu0
    %v109 = vadd.f32 %v37, %v108
    %v110 = vpop.f32.mrf.mxu0
    %111 = vdwg.mxu0
    %v113 = vsel %vm38, 0.0, 0
    %115 = vmatprep.subr.mxu0 0.0
    %116 = vmatpush1.msra.mxu0 0.0
    %117 = vmatprep.subr.mxu0 0.0
    %118 = vmatpush1.msra.mxu0 0.0
    %119 = vmatprep.subr.mxu0 0.0
    %120 = vmatpush1.msra.mxu0 0.0
    %121 = vmatprep.subr.mxu0 0.0
    %122 = vmatpush1.msra.mxu0 0.0
    %123 = vmatprep.subr.mxu0 0.0
    %124 = vmatpush1.msra.mxu0 0.0
    %125 = vmatprep.subr.mxu0 0.0
    %126 = vmatpush1.msra.mxu0 0.0
    %127 = vmatprep.subr.mxu0 0.0
    %128 = vmatpush1.msra.mxu0 0.0
    %129 = vmatprep.subr.mxu0 0.0
    %130 = vmatpush1.msra.mxu0 0.0
    %131 = vmatprep.subr.mxu0 0.0
    %132 = vmatpush1.msra.mxu0 0.0
    %133 = vmatprep.subr.mxu0 0.0
    %134 = vmatpush1.msra.mxu0 0.0
    %135 = vmatprep.subr.mxu0 0.0
    %136 = vmatpush1.msra.mxu0 0.0
    %137 = vmatprep.subr.mxu0 0.0
    %138 = vmatpush1.msra.mxu0 0.0
    %139 = vmatprep.subr.mxu0 0.0
    %140 = vmatpush1.msra.mxu0 %v22
    %141 = vmatprep.subr.mxu0 0.0
    %142 = vmatpush1.msra.mxu0 %v21
    %143 = vmatprep.subr.mxu0 0.0
    %144 = vmatpush1.msra.mxu0 %v20
    %145 = vmatprep.subr.mxu0 0.0
    %146 = vmatpush1.msra.mxu0 %v19
    %147 = vmatprep.subr.mxu0 0.0
    %148 = vmatpush2.msra.mxu0 0.0
    %149 = vmatprep.subr.mxu0 0.0
    %150 = vmatpush2.msra.mxu0 0.0
    %151 = vmatprep.subr.mxu0 0.0
    %152 = vmatpush2.msra.mxu0 0.0
    %153 = vmatprep.subr.mxu0 0.0
    %154 = vmatpush2.msra.mxu0 0.0
    %155 = vmatprep.subr.mxu0 0.0
    %156 = vmatpush2.msra.mxu0 0.0
    %157 = vmatprep.subr.mxu0 0.0
    %158 = vmatpush2.msra.mxu0 0.0
    %159 = vmatprep.subr.mxu0 0.0
    %160 = vmatpush2.msra.mxu0 0.0
    %161 = vmatprep.subr.mxu0 0.0
    %162 = vmatpush2.msra.mxu0 0.0
    %163 = vmatprep.subr.mxu0 0.0
    %164 = vmatpush2.msra.mxu0 0.0
    %165 = vmatprep.subr.mxu0 0.0
    %166 = vmatpush2.msra.mxu0 0.0
    %167 = vmatprep.subr.mxu0 0.0
    %168 = vmatpush2.msra.mxu0 0.0
    %169 = vmatprep.subr.mxu0 0.0
    %170 = vmatpush2.msra.mxu0 0.0
    %171 = vmatprep.subr.mxu0 0.0
    %172 = vmatpush2.msra.mxu0 0.0
    %173 = vmatprep.subr.mxu0 0.0
    %174 = vmatpush2.msra.mxu0 0.0
    %175 = vmatprep.subr.mxu0 0.0
    %176 = vmatpush2.msra.mxu0 0.0
    %177 = vmatprep.subr.mxu0 0.0
    %178 = vmatpush2.msra.mxu0 0.0
    %179 = vmatprep.mubr.f32.mxu0 0.0
    %180 = vmatmul.mubr.f32.gmra.mxu0 %v113
    %v181 = vpop.f32.mrf.mxu0
    %v182 = vadd.f32 0.0, %v181
    %v183 = vpop.f32.mrf.mxu0
    %184 = vdwg.mxu0
    %v185 = vadd.f32 %v109, %v182
    %v186 = vtanh.pop %v185
    %187 = vmatprep.subr.mxu0 0.0
    %188 = vmatpush1.msra.mxu0 0.0
    %189 = vmatprep.subr.mxu0 0.0
    %190 = vmatpush1.msra.mxu0 0.0
    %191 = vmatprep.subr.mxu0 0.0
    %192 = vmatpush1.msra.mxu0 0.0
    %193 = vmatprep.subr.mxu0 0.0
    %194 = vmatpush1.msra.mxu0 0.0
    %195 = vmatprep.subr.mxu0 0.0
    %196 = vmatpush1.msra.mxu0 0.0
    %197 = vmatprep.subr.mxu0 0.0
    %198 = vmatpush1.msra.mxu0 0.0
    %199 = vmatprep.subr.mxu0 0.0
    %200 = vmatpush1.msra.mxu0 0.0
    %201 = vmatprep.subr.mxu0 0.0
    %202 = vmatpush1.msra.mxu0 0.0
    %203 = vmatprep.subr.mxu0 0.0
    %204 = vmatpush1.msra.mxu0 0.0
    %205 = vmatprep.subr.mxu0 0.0
    %206 = vmatpush1.msra.mxu0 0.0
    %207 = vmatprep.subr.mxu0 0.0
    %208 = vmatpush1.msra.mxu0 0.0
    %209 = vmatprep.subr.mxu0 0.0
    %210 = vmatpush1.msra.mxu0 0.0
    %211 = vmatprep.subr.mxu0 0.0
    %212 = vmatpush1.msra.mxu0 %v31
    %213 = vmatprep.subr.mxu0 0.0
    %214 = vmatpush1.msra.mxu0 %v30
    %215 = vmatprep.subr.mxu0 0.0
    %216 = vmatpush1.msra.mxu0 %v29
    %217 = vmatprep.subr.mxu0 0.0
    %218 = vmatpush1.msra.mxu0 %v28
    %219 = vmatprep.subr.mxu0 0.0
    %220 = vmatpush2.msra.mxu0 0.0
    %221 = vmatprep.subr.mxu0 0.0
    %222 = vmatpush2.msra.mxu0 0.0
    %223 = vmatprep.subr.mxu0 0.0
    %224 = vmatpush2.msra.mxu0 0.0
    %225 = vmatprep.subr.mxu0 0.0
    %226 = vmatpush2.msra.mxu0 0.0
    %227 = vmatprep.subr.mxu0 0.0
    %228 = vmatpush2.msra.mxu0 0.0
    %229 = vmatprep.subr.mxu0 0.0
    %230 = vmatpush2.msra.mxu0 0.0
    %231 = vmatprep.subr.mxu0 0.0
    %232 = vmatpush2.msra.mxu0 0.0
    %233 = vmatprep.subr.mxu0 0.0
    %234 = vmatpush2.msra.mxu0 0.0
    %235 = vmatprep.subr.mxu0 0.0
    %236 = vmatpush2.msra.mxu0 0.0
    %237 = vmatprep.subr.mxu0 0.0
    %238 = vmatpush2.msra.mxu0 0.0
    %239 = vmatprep.subr.mxu0 0.0
    %240 = vmatpush2.msra.mxu0 0.0
    %241 = vmatprep.subr.mxu0 0.0
    %242 = vmatpush2.msra.mxu0 0.0
    %243 = vmatprep.subr.mxu0 0.0
    %244 = vmatpush2.msra.mxu0 0.0
    %245 = vmatprep.subr.mxu0 0.0
    %246 = vmatpush2.msra.mxu0 0.0
    %247 = vmatprep.subr.mxu0 0.0
    %248 = vmatpush2.msra.mxu0 0.0
    %249 = vmatprep.subr.mxu0 0.0
    %250 = vmatpush2.msra.mxu0 0.0
    %251 = vmatprep.mubr.f32.mxu0 0.0
    %252 = vmatmul.mubr.f32.gmra.mxu0 %v113
    %v253 = vpop.f32.mrf.mxu0
    %v254 = vadd.f32 0.0, %v253
    %v255 = vpop.f32.mrf.mxu0
    %256 = vdwg.mxu0
    %v258 = vsel %vm38, %v186, 0
    %260 = vmatprep.subr.mxu0 0.0
    %261 = vmatpush1.msra.mxu0 0.0
    %262 = vmatprep.subr.mxu0 0.0
    %263 = vmatpush1.msra.mxu0 0.0
    %264 = vmatprep.subr.mxu0 0.0
    %265 = vmatpush1.msra.mxu0 0.0
    %266 = vmatprep.subr.mxu0 0.0
    %267 = vmatpush1.msra.mxu0 0.0
    %268 = vmatprep.subr.mxu0 0.0
    %269 = vmatpush1.msra.mxu0 0.0
    %270 = vmatprep.subr.mxu0 0.0
    %271 = vmatpush1.msra.mxu0 0.0
    %272 = vmatprep.subr.mxu0 0.0
    %273 = vmatpush1.msra.mxu0 0.0
    %274 = vmatprep.subr.mxu0 0.0
    %275 = vmatpush1.msra.mxu0 0.0
    %276 = vmatprep.subr.mxu0 0.0
    %277 = vmatpush1.msra.mxu0 0.0
    %278 = vmatprep.subr.mxu0 0.0
    %279 = vmatpush1.msra.mxu0 0.0
    %280 = vmatprep.subr.mxu0 0.0
    %281 = vmatpush1.msra.mxu0 0.0
    %282 = vmatprep.subr.mxu0 0.0
    %283 = vmatpush1.msra.mxu0 0.0
    %284 = vmatprep.subr.mxu0 0.0
    %285 = vmatpush1.msra.mxu0 %v27
    %286 = vmatprep.subr.mxu0 0.0
    %287 = vmatpush1.msra.mxu0 %v26
    %288 = vmatprep.subr.mxu0 0.0
    %289 = vmatpush1.msra.mxu0 %v25
    %290 = vmatprep.subr.mxu0 0.0
    %291 = vmatpush1.msra.mxu0 %v24
    %292 = vmatprep.subr.mxu0 0.0
    %293 = vmatpush2.msra.mxu0 0.0
    %294 = vmatprep.subr.mxu0 0.0
    %295 = vmatpush2.msra.mxu0 0.0
    %296 = vmatprep.subr.mxu0 0.0
    %297 = vmatpush2.msra.mxu0 0.0
    %298 = vmatprep.subr.mxu0 0.0
    %299 = vmatpush2.msra.mxu0 0.0
    %300 = vmatprep.subr.mxu0 0.0
    %301 = vmatpush2.msra.mxu0 0.0
    %302 = vmatprep.subr.mxu0 0.0
    %303 = vmatpush2.msra.mxu0 0.0
    %304 = vmatprep.subr.mxu0 0.0
    %305 = vmatpush2.msra.mxu0 0.0
    %306 = vmatprep.subr.mxu0 0.0
    %307 = vmatpush2.msra.mxu0 0.0
    %308 = vmatprep.subr.mxu0 0.0
    %309 = vmatpush2.msra.mxu0 0.0
    %310 = vmatprep.subr.mxu0 0.0
    %311 = vmatpush2.msra.mxu0 0.0
    %312 = vmatprep.subr.mxu0 0.0
    %313 = vmatpush2.msra.mxu0 0.0
    %314 = vmatprep.subr.mxu0 0.0
    %315 = vmatpush2.msra.mxu0 0.0
    %316 = vmatprep.subr.mxu0 0.0
    %317 = vmatpush2.msra.mxu0 0.0
    %318 = vmatprep.subr.mxu0 0.0
    %319 = vmatpush2.msra.mxu0 0.0
    %320 = vmatprep.subr.mxu0 0.0
    %321 = vmatpush2.msra.mxu0 0.0
    %322 = vmatprep.subr.mxu0 0.0
    %323 = vmatpush2.msra.mxu0 0.0
    %324 = vmatprep.mubr.f32.mxu0 0.0
    %325 = vmatmul.mubr.f32.gmra.mxu0 %v258
    %v326 = vpop.f32.mrf.mxu0
    %v327 = vadd.f32 %v254, %v326
    %v328 = vpop.f32.mrf.mxu0
    %329 = vdwg.mxu0
    %v330 = vadd.f32 %v327, %v32
    %v331 = vtanh.pop %v330
    %332 = vmatprep.subr.mxu0 0.0
    %333 = vmatpush1.msra.mxu0 0.0
    %334 = vmatprep.subr.mxu0 0.0
    %335 = vmatpush1.msra.mxu0 0.0
    %336 = vmatprep.subr.mxu0 0.0
    %337 = vmatpush1.msra.mxu0 0.0
    %338 = vmatprep.subr.mxu0 0.0
    %339 = vmatpush1.msra.mxu0 0.0
    %340 = vmatprep.subr.mxu0 0.0
    %341 = vmatpush1.msra.mxu0 0.0
    %342 = vmatprep.subr.mxu0 0.0
    %343 = vmatpush1.msra.mxu0 0.0
    %344 = vmatprep.subr.mxu0 0.0
    %345 = vmatpush1.msra.mxu0 0.0
    %346 = vmatprep.subr.mxu0 0.0
    %347 = vmatpush1.msra.mxu0 0.0
    %348 = vmatprep.subr.mxu0 0.0
    %349 = vmatpush1.msra.mxu0 0.0
    %350 = vmatprep.subr.mxu0 0.0
    %351 = vmatpush1.msra.mxu0 0.0
    %352 = vmatprep.subr.mxu0 0.0
    %353 = vmatpush1.msra.mxu0 0.0
    %354 = vmatprep.subr.mxu0 0.0
    %355 = vmatpush1.msra.mxu0 0.0
    %356 = vmatprep.subr.mxu0 0.0
    %357 = vmatpush1.msra.mxu0 %v22
    %358 = vmatprep.subr.mxu0 0.0
    %359 = vmatpush1.msra.mxu0 %v21
    %360 = vmatprep.subr.mxu0 0.0
    %361 = vmatpush1.msra.mxu0 %v20
    %362 = vmatprep.subr.mxu0 0.0
    %363 = vmatpush1.msra.mxu0 %v19
    %364 = vmatprep.subr.mxu0 0.0
    %365 = vmatpush2.msra.mxu0 0.0
    %366 = vmatprep.subr.mxu0 0.0
    %367 = vmatpush2.msra.mxu0 0.0
    %368 = vmatprep.subr.mxu0 0.0
    %369 = vmatpush2.msra.mxu0 0.0
    %370 = vmatprep.subr.mxu0 0.0
    %371 = vmatpush2.msra.mxu0 0.0
    %372 = vmatprep.subr.mxu0 0.0
    %373 = vmatpush2.msra.mxu0 0.0
    %374 = vmatprep.subr.mxu0 0.0
    %375 = vmatpush2.msra.mxu0 0.0
    %376 = vmatprep.subr.mxu0 0.0
    %377 = vmatpush2.msra.mxu0 0.0
    %378 = vmatprep.subr.mxu0 0.0
    %379 = vmatpush2.msra.mxu0 0.0
    %380 = vmatprep.subr.mxu0 0.0
    %381 = vmatpush2.msra.mxu0 0.0
    %382 = vmatprep.subr.mxu0 0.0
    %383 = vmatpush2.msra.mxu0 0.0
    %384 = vmatprep.subr.mxu0 0.0
    %385 = vmatpush2.msra.mxu0 0.0
    %386 = vmatprep.subr.mxu0 0.0
    %387 = vmatpush2.msra.mxu0 0.0
    %388 = vmatprep.subr.mxu0 0.0
    %389 = vmatpush2.msra.mxu0 0.0
    %390 = vmatprep.subr.mxu0 0.0
    %391 = vmatpush2.msra.mxu0 0.0
    %392 = vmatprep.subr.mxu0 0.0
    %393 = vmatpush2.msra.mxu0 0.0
    %394 = vmatprep.subr.mxu0 0.0
    %395 = vmatpush2.msra.mxu0 0.0
    %396 = vmatprep.mubr.f32.mxu0 0.0
    %397 = vmatmul.mubr.f32.gmra.mxu0 %v258
    %v398 = vpop.f32.mrf.mxu0
    %v399 = vadd.f32 0.0, %v398
    %v400 = vpop.f32.mrf.mxu0
    %401 = vdwg.mxu0
    %v403 = vrot.slane %v399, 7
    %v405 = vadd.f32 %v109, %v403
    %v406 = vtanh.pop %v405
    %v408 = vsel %vm38, %v331, 0
    %410 = vmatprep.subr.mxu0 0.0
    %411 = vmatpush1.msra.mxu0 0.0
    %412 = vmatprep.subr.mxu0 0.0
    %413 = vmatpush1.msra.mxu0 0.0
    %414 = vmatprep.subr.mxu0 0.0
    %415 = vmatpush1.msra.mxu0 0.0
    %416 = vmatprep.subr.mxu0 0.0
    %417 = vmatpush1.msra.mxu0 0.0
    %418 = vmatprep.subr.mxu0 0.0
    %419 = vmatpush1.msra.mxu0 0.0
    %420 = vmatprep.subr.mxu0 0.0
    %421 = vmatpush1.msra.mxu0 0.0
    %422 = vmatprep.subr.mxu0 0.0
    %423 = vmatpush1.msra.mxu0 0.0
    %424 = vmatprep.subr.mxu0 0.0
    %425 = vmatpush1.msra.mxu0 0.0
    %426 = vmatprep.subr.mxu0 0.0
    %427 = vmatpush1.msra.mxu0 0.0
    %428 = vmatprep.subr.mxu0 0.0
    %429 = vmatpush1.msra.mxu0 0.0
    %430 = vmatprep.subr.mxu0 0.0
    %431 = vmatpush1.msra.mxu0 0.0
    %432 = vmatprep.subr.mxu0 0.0
    %433 = vmatpush1.msra.mxu0 0.0
    %434 = vmatprep.subr.mxu0 0.0
    %435 = vmatpush1.msra.mxu0 %v31
    %436 = vmatprep.subr.mxu0 0.0
    %437 = vmatpush1.msra.mxu0 %v30
    %438 = vmatprep.subr.mxu0 0.0
    %439 = vmatpush1.msra.mxu0 %v29
    %440 = vmatprep.subr.mxu0 0.0
    %441 = vmatpush1.msra.mxu0 %v28
    %442 = vmatprep.subr.mxu0 0.0
    %443 = vmatpush2.msra.mxu0 0.0
    %444 = vmatprep.subr.mxu0 0.0
    %445 = vmatpush2.msra.mxu0 0.0
    %446 = vmatprep.subr.mxu0 0.0
    %447 = vmatpush2.msra.mxu0 0.0
    %448 = vmatprep.subr.mxu0 0.0
    %449 = vmatpush2.msra.mxu0 0.0
    %450 = vmatprep.subr.mxu0 0.0
    %451 = vmatpush2.msra.mxu0 0.0
    %452 = vmatprep.subr.mxu0 0.0
    %453 = vmatpush2.msra.mxu0 0.0
    %454 = vmatprep.subr.mxu0 0.0
    %455 = vmatpush2.msra.mxu0 0.0
    %456 = vmatprep.subr.mxu0 0.0
    %457 = vmatpush2.msra.mxu0 0.0
    %458 = vmatprep.subr.mxu0 0.0
    %459 = vmatpush2.msra.mxu0 0.0
    %460 = vmatprep.subr.mxu0 0.0
    %461 = vmatpush2.msra.mxu0 0.0
    %462 = vmatprep.subr.mxu0 0.0
    %463 = vmatpush2.msra.mxu0 0.0
    %464 = vmatprep.subr.mxu0 0.0
    %465 = vmatpush2.msra.mxu0 0.0
    %466 = vmatprep.subr.mxu0 0.0
    %467 = vmatpush2.msra.mxu0 0.0
    %468 = vmatprep.subr.mxu0 0.0
    %469 = vmatpush2.msra.mxu0 0.0
    %470 = vmatprep.subr.mxu0 0.0
    %471 = vmatpush2.msra.mxu0 0.0
    %472 = vmatprep.subr.mxu0 0.0
    %473 = vmatpush2.msra.mxu0 0.0
    %474 = vmatprep.mubr.f32.mxu0 0.0
    %475 = vmatmul.mubr.f32.gmra.mxu0 %v408
    %v476 = vpop.f32.mrf.mxu0
    %v477 = vadd.f32 0.0, %v476
    %v478 = vpop.f32.mrf.mxu0
    %479 = vdwg.mxu0
    %v481 = vrot.slane %v406, 1
    %v482 = vsel %vm38, %v481, 0
    %484 = vmatprep.subr.mxu0 0.0
    %485 = vmatpush1.msra.mxu0 0.0
    %486 = vmatprep.subr.mxu0 0.0
    %487 = vmatpush1.msra.mxu0 0.0
    %488 = vmatprep.subr.mxu0 0.0
    %489 = vmatpush1.msra.mxu0 0.0
    %490 = vmatprep.subr.mxu0 0.0
    %491 = vmatpush1.msra.mxu0 0.0
    %492 = vmatprep.subr.mxu0 0.0
    %493 = vmatpush1.msra.mxu0 0.0
    %494 = vmatprep.subr.mxu0 0.0
    %495 = vmatpush1.msra.mxu0 0.0
    %496 = vmatprep.subr.mxu0 0.0
    %497 = vmatpush1.msra.mxu0 0.0
    %498 = vmatprep.subr.mxu0 0.0
    %499 = vmatpush1.msra.mxu0 0.0
    %500 = vmatprep.subr.mxu0 0.0
    %501 = vmatpush1.msra.mxu0 0.0
    %502 = vmatprep.subr.mxu0 0.0
    %503 = vmatpush1.msra.mxu0 0.0
    %504 = vmatprep.subr.mxu0 0.0
    %505 = vmatpush1.msra.mxu0 0.0
    %506 = vmatprep.subr.mxu0 0.0
    %507 = vmatpush1.msra.mxu0 0.0
    %508 = vmatprep.subr.mxu0 0.0
    %509 = vmatpush1.msra.mxu0 %v27
    %510 = vmatprep.subr.mxu0 0.0
    %511 = vmatpush1.msra.mxu0 %v26
    %512 = vmatprep.subr.mxu0 0.0
    %513 = vmatpush1.msra.mxu0 %v25
    %514 = vmatprep.subr.mxu0 0.0
    %515 = vmatpush1.msra.mxu0 %v24
    %516 = vmatprep.subr.mxu0 0.0
    %517 = vmatpush2.msra.mxu0 0.0
    %518 = vmatprep.subr.mxu0 0.0
    %519 = vmatpush2.msra.mxu0 0.0
    %520 = vmatprep.subr.mxu0 0.0
    %521 = vmatpush2.msra.mxu0 0.0
    %522 = vmatprep.subr.mxu0 0.0
    %523 = vmatpush2.msra.mxu0 0.0
    %524 = vmatprep.subr.mxu0 0.0
    %525 = vmatpush2.msra.mxu0 0.0
    %526 = vmatprep.subr.mxu0 0.0
    %527 = vmatpush2.msra.mxu0 0.0
    %528 = vmatprep.subr.mxu0 0.0
    %529 = vmatpush2.msra.mxu0 0.0
    %530 = vmatprep.subr.mxu0 0.0
    %531 = vmatpush2.msra.mxu0 0.0
    %532 = vmatprep.subr.mxu0 0.0
    %533 = vmatpush2.msra.mxu0 0.0
    %534 = vmatprep.subr.mxu0 0.0
    %535 = vmatpush2.msra.mxu0 0.0
    %536 = vmatprep.subr.mxu0 0.0
    %537 = vmatpush2.msra.mxu0 0.0
    %538 = vmatprep.subr.mxu0 0.0
    %539 = vmatpush2.msra.mxu0 0.0
    %540 = vmatprep.subr.mxu0 0.0
    %541 = vmatpush2.msra.mxu0 0.0
    %542 = vmatprep.subr.mxu0 0.0
    %543 = vmatpush2.msra.mxu0 0.0
    %544 = vmatprep.subr.mxu0 0.0
    %545 = vmatpush2.msra.mxu0 0.0
    %546 = vmatprep.subr.mxu0 0.0
    %547 = vmatpush2.msra.mxu0 0.0
    %548 = vmatprep.mubr.f32.mxu0 0.0
    %549 = vmatmul.mubr.f32.gmra.mxu0 %v482
    %v550 = vpop.f32.mrf.mxu0
    %v551 = vadd.f32 %v477, %v550
    %v552 = vpop.f32.mrf.mxu0
    %553 = vdwg.mxu0
    %v554 = vadd.f32 %v551, %v32
    %v555 = vtanh.pop %v554
    %556 = vmatprep.subr.mxu0 0.0
    %557 = vmatpush1.msra.mxu0 0.0
    %558 = vmatprep.subr.mxu0 0.0
    %559 = vmatpush1.msra.mxu0 0.0
    %560 = vmatprep.subr.mxu0 0.0
    %561 = vmatpush1.msra.mxu0 0.0
    %562 = vmatprep.subr.mxu0 0.0
    %563 = vmatpush1.msra.mxu0 0.0
    %564 = vmatprep.subr.mxu0 0.0
    %565 = vmatpush1.msra.mxu0 0.0
    %566 = vmatprep.subr.mxu0 0.0
    %567 = vmatpush1.msra.mxu0 0.0
    %568 = vmatprep.subr.mxu0 0.0
    %569 = vmatpush1.msra.mxu0 0.0
    %570 = vmatprep.subr.mxu0 0.0
    %571 = vmatpush1.msra.mxu0 0.0
    %572 = vmatprep.subr.mxu0 0.0
    %573 = vmatpush1.msra.mxu0 0.0
    %574 = vmatprep.subr.mxu0 0.0
    %575 = vmatpush1.msra.mxu0 0.0
    %576 = vmatprep.subr.mxu0 0.0
    %577 = vmatpush1.msra.mxu0 0.0
    %578 = vmatprep.subr.mxu0 0.0
    %579 = vmatpush1.msra.mxu0 0.0
    %580 = vmatprep.subr.mxu0 0.0
    %581 = vmatpush1.msra.mxu0 %v22
    %582 = vmatprep.subr.mxu0 0.0
    %583 = vmatpush1.msra.mxu0 %v21
    %584 = vmatprep.subr.mxu0 0.0
    %585 = vmatpush1.msra.mxu0 %v20
    %586 = vmatprep.subr.mxu0 0.0
    %587 = vmatpush1.msra.mxu0 %v19
    %588 = vmatprep.subr.mxu0 0.0
    %589 = vmatpush2.msra.mxu0 0.0
    %590 = vmatprep.subr.mxu0 0.0
    %591 = vmatpush2.msra.mxu0 0.0
    %592 = vmatprep.subr.mxu0 0.0
    %593 = vmatpush2.msra.mxu0 0.0
    %594 = vmatprep.subr.mxu0 0.0
    %595 = vmatpush2.msra.mxu0 0.0
    %596 = vmatprep.subr.mxu0 0.0
    %597 = vmatpush2.msra.mxu0 0.0
    %598 = vmatprep.subr.mxu0 0.0
    %599 = vmatpush2.msra.mxu0 0.0
    %600 = vmatprep.subr.mxu0 0.0
    %601 = vmatpush2.msra.mxu0 0.0
    %602 = vmatprep.subr.mxu0 0.0
    %603 = vmatpush2.msra.mxu0 0.0
    %604 = vmatprep.subr.mxu0 0.0
    %605 = vmatpush2.msra.mxu0 0.0
    %606 = vmatprep.subr.mxu0 0.0
    %607 = vmatpush2.msra.mxu0 0.0
    %608 = vmatprep.subr.mxu0 0.0
    %609 = vmatpush2.msra.mxu0 0.0
    %610 = vmatprep.subr.mxu0 0.0
    %611 = vmatpush2.msra.mxu0 0.0
    %612 = vmatprep.subr.mxu0 0.0
    %613 = vmatpush2.msra.mxu0 0.0
    %614 = vmatprep.subr.mxu0 0.0
    %615 = vmatpush2.msra.mxu0 0.0
    %616 = vmatprep.subr.mxu0 0.0
    %617 = vmatpush2.msra.mxu0 0.0
    %618 = vmatprep.subr.mxu0 0.0
    %619 = vmatpush2.msra.mxu0 0.0
    %620 = vmatprep.mubr.f32.mxu0 0.0
    %621 = vmatmul.mubr.f32.gmra.mxu0 %v482
    %v622 = vpop.f32.mrf.mxu0
    %v623 = vadd.f32 0.0, %v622
    %v624 = vpop.f32.mrf.mxu0
    %625 = vdwg.mxu0
    %v627 = vrot.slane %v623, 6
    %v629 = vadd.f32 %v109, %v627
    %v630 = vtanh.pop %v629
    %v632 = vsel %vm38, %v555, 0
    %634 = vmatprep.subr.mxu0 0.0
    %635 = vmatpush1.msra.mxu0 0.0
    %636 = vmatprep.subr.mxu0 0.0
    %637 = vmatpush1.msra.mxu0 0.0
    %638 = vmatprep.subr.mxu0 0.0
    %639 = vmatpush1.msra.mxu0 0.0
    %640 = vmatprep.subr.mxu0 0.0
    %641 = vmatpush1.msra.mxu0 0.0
    %642 = vmatprep.subr.mxu0 0.0
    %643 = vmatpush1.msra.mxu0 0.0
    %644 = vmatprep.subr.mxu0 0.0
    %645 = vmatpush1.msra.mxu0 0.0
    %646 = vmatprep.subr.mxu0 0.0
    %647 = vmatpush1.msra.mxu0 0.0
    %648 = vmatprep.subr.mxu0 0.0
    %649 = vmatpush1.msra.mxu0 0.0
    %650 = vmatprep.subr.mxu0 0.0
    %651 = vmatpush1.msra.mxu0 0.0
    %652 = vmatprep.subr.mxu0 0.0
    %653 = vmatpush1.msra.mxu0 0.0
    %654 = vmatprep.subr.mxu0 0.0
    %655 = vmatpush1.msra.mxu0 0.0
    %656 = vmatprep.subr.mxu0 0.0
    %657 = vmatpush1.msra.mxu0 0.0
    %658 = vmatprep.subr.mxu0 0.0
    %659 = vmatpush1.msra.mxu0 %v31
    %660 = vmatprep.subr.mxu0 0.0
    %661 = vmatpush1.msra.mxu0 %v30
    %662 = vmatprep.subr.mxu0 0.0
    %663 = vmatpush1.msra.mxu0 %v29
    %664 = vmatprep.subr.mxu0 0.0
    %665 = vmatpush1.msra.mxu0 %v28
    %666 = vmatprep.subr.mxu0 0.0
    %667 = vmatpush2.msra.mxu0 0.0
    %668 = vmatprep.subr.mxu0 0.0
    %669 = vmatpush2.msra.mxu0 0.0
    %670 = vmatprep.subr.mxu0 0.0
    %671 = vmatpush2.msra.mxu0 0.0
    %672 = vmatprep.subr.mxu0 0.0
    %673 = vmatpush2.msra.mxu0 0.0
    %674 = vmatprep.subr.mxu0 0.0
    %675 = vmatpush2.msra.mxu0 0.0
    %676 = vmatprep.subr.mxu0 0.0
    %677 = vmatpush2.msra.mxu0 0.0
    %678 = vmatprep.subr.mxu0 0.0
    %679 = vmatpush2.msra.mxu0 0.0
    %680 = vmatprep.subr.mxu0 0.0
    %681 = vmatpush2.msra.mxu0 0.0
    %682 = vmatprep.subr.mxu0 0.0
    %683 = vmatpush2.msra.mxu0 0.0
    %684 = vmatprep.subr.mxu0 0.0
    %685 = vmatpush2.msra.mxu0 0.0
    %686 = vmatprep.subr.mxu0 0.0
    %687 = vmatpush2.msra.mxu0 0.0
    %688 = vmatprep.subr.mxu0 0.0
    %689 = vmatpush2.msra.mxu0 0.0
    %690 = vmatprep.subr.mxu0 0.0
    %691 = vmatpush2.msra.mxu0 0.0
    %692 = vmatprep.subr.mxu0 0.0
    %693 = vmatpush2.msra.mxu0 0.0
    %694 = vmatprep.subr.mxu0 0.0
    %695 = vmatpush2.msra.mxu0 0.0
    %696 = vmatprep.subr.mxu0 0.0
    %697 = vmatpush2.msra.mxu0 0.0
    %698 = vmatprep.mubr.f32.mxu0 0.0
    %699 = vmatmul.mubr.f32.gmra.mxu0 %v632
    %v700 = vpop.f32.mrf.mxu0
    %v701 = vadd.f32 0.0, %v700
    %v702 = vpop.f32.mrf.mxu0
    %703 = vdwg.mxu0
    %v705 = vrot.slane %v630, 2
    %v706 = vsel %vm38, %v705, 0
    %708 = vmatprep.subr.mxu0 0.0
    %709 = vmatpush1.msra.mxu0 0.0
    %710 = vmatprep.subr.mxu0 0.0
    %711 = vmatpush1.msra.mxu0 0.0
    %712 = vmatprep.subr.mxu0 0.0
    %713 = vmatpush1.msra.mxu0 0.0
    %714 = vmatprep.subr.mxu0 0.0
    %715 = vmatpush1.msra.mxu0 0.0
    %716 = vmatprep.subr.mxu0 0.0
    %717 = vmatpush1.msra.mxu0 0.0
    %718 = vmatprep.subr.mxu0 0.0
    %719 = vmatpush1.msra.mxu0 0.0
    %720 = vmatprep.subr.mxu0 0.0
    %721 = vmatpush1.msra.mxu0 0.0
    %722 = vmatprep.subr.mxu0 0.0
    %723 = vmatpush1.msra.mxu0 0.0
    %724 = vmatprep.subr.mxu0 0.0
    %725 = vmatpush1.msra.mxu0 0.0
    %726 = vmatprep.subr.mxu0 0.0
    %727 = vmatpush1.msra.mxu0 0.0
    %728 = vmatprep.subr.mxu0 0.0
    %729 = vmatpush1.msra.mxu0 0.0
    %730 = vmatprep.subr.mxu0 0.0
    %731 = vmatpush1.msra.mxu0 0.0
    %732 = vmatprep.subr.mxu0 0.0
    %733 = vmatpush1.msra.mxu0 %v27
    %734 = vmatprep.subr.mxu0 0.0
    %735 = vmatpush1.msra.mxu0 %v26
    %736 = vmatprep.subr.mxu0 0.0
    %737 = vmatpush1.msra.mxu0 %v25
    %738 = vmatprep.subr.mxu0 0.0
    %739 = vmatpush1.msra.mxu0 %v24
    %740 = vmatprep.subr.mxu0 0.0
    %741 = vmatpush2.msra.mxu0 0.0
    %742 = vmatprep.subr.mxu0 0.0
    %743 = vmatpush2.msra.mxu0 0.0
    %744 = vmatprep.subr.mxu0 0.0
    %745 = vmatpush2.msra.mxu0 0.0
    %746 = vmatprep.subr.mxu0 0.0
    %747 = vmatpush2.msra.mxu0 0.0
    %748 = vmatprep.subr.mxu0 0.0
    %749 = vmatpush2.msra.mxu0 0.0
    %750 = vmatprep.subr.mxu0 0.0
    %751 = vmatpush2.msra.mxu0 0.0
    %752 = vmatprep.subr.mxu0 0.0
    %753 = vmatpush2.msra.mxu0 0.0
    %754 = vmatprep.subr.mxu0 0.0
    %755 = vmatpush2.msra.mxu0 0.0
    %756 = vmatprep.subr.mxu0 0.0
    %757 = vmatpush2.msra.mxu0 0.0
    %758 = vmatprep.subr.mxu0 0.0
    %759 = vmatpush2.msra.mxu0 0.0
    %760 = vmatprep.subr.mxu0 0.0
    %761 = vmatpush2.msra.mxu0 0.0
    %762 = vmatprep.subr.mxu0 0.0
    %763 = vmatpush2.msra.mxu0 0.0
    %764 = vmatprep.subr.mxu0 0.0
    %765 = vmatpush2.msra.mxu0 0.0
    %766 = vmatprep.subr.mxu0 0.0
    %767 = vmatpush2.msra.mxu0 0.0
    %768 = vmatprep.subr.mxu0 0.0
    %769 = vmatpush2.msra.mxu0 0.0
    %770 = vmatprep.subr.mxu0 0.0
    %771 = vmatpush2.msra.mxu0 0.0
    %772 = vmatprep.mubr.f32.mxu0 0.0
    %773 = vmatmul.mubr.f32.gmra.mxu0 %v706
    %v774 = vpop.f32.mrf.mxu0
    %v775 = vadd.f32 %v701, %v774
    %v776 = vpop.f32.mrf.mxu0
    %777 = vdwg.mxu0
    %v778 = vadd.f32 %v775, %v32
    %v779 = vtanh.pop %v778
    %780 = vmatprep.subr.mxu0 0.0
    %781 = vmatpush1.msra.mxu0 0.0
    %782 = vmatprep.subr.mxu0 0.0
    %783 = vmatpush1.msra.mxu0 0.0
    %784 = vmatprep.subr.mxu0 0.0
    %785 = vmatpush1.msra.mxu0 0.0
    %786 = vmatprep.subr.mxu0 0.0
    %787 = vmatpush1.msra.mxu0 0.0
    %788 = vmatprep.subr.mxu0 0.0
    %789 = vmatpush1.msra.mxu0 0.0
    %790 = vmatprep.subr.mxu0 0.0
    %791 = vmatpush1.msra.mxu0 0.0
    %792 = vmatprep.subr.mxu0 0.0
    %793 = vmatpush1.msra.mxu0 0.0
    %794 = vmatprep.subr.mxu0 0.0
    %795 = vmatpush1.msra.mxu0 0.0
    %796 = vmatprep.subr.mxu0 0.0
    %797 = vmatpush1.msra.mxu0 0.0
    %798 = vmatprep.subr.mxu0 0.0
    %799 = vmatpush1.msra.mxu0 0.0
    %800 = vmatprep.subr.mxu0 0.0
    %801 = vmatpush1.msra.mxu0 0.0
    %802 = vmatprep.subr.mxu0 0.0
    %803 = vmatpush1.msra.mxu0 0.0
    %804 = vmatprep.subr.mxu0 0.0
    %805 = vmatpush1.msra.mxu0 %v22
    %806 = vmatprep.subr.mxu0 0.0
    %807 = vmatpush1.msra.mxu0 %v21
    %808 = vmatprep.subr.mxu0 0.0
    %809 = vmatpush1.msra.mxu0 %v20
    %810 = vmatprep.subr.mxu0 0.0
    %811 = vmatpush1.msra.mxu0 %v19
    %812 = vmatprep.subr.mxu0 0.0
    %813 = vmatpush2.msra.mxu0 0.0
    %814 = vmatprep.subr.mxu0 0.0
    %815 = vmatpush2.msra.mxu0 0.0
    %816 = vmatprep.subr.mxu0 0.0
    %817 = vmatpush2.msra.mxu0 0.0
    %818 = vmatprep.subr.mxu0 0.0
    %819 = vmatpush2.msra.mxu0 0.0
    %820 = vmatprep.subr.mxu0 0.0
    %821 = vmatpush2.msra.mxu0 0.0
    %822 = vmatprep.subr.mxu0 0.0
    %823 = vmatpush2.msra.mxu0 0.0
    %824 = vmatprep.subr.mxu0 0.0
    %825 = vmatpush2.msra.mxu0 0.0
    %826 = vmatprep.subr.mxu0 0.0
    %827 = vmatpush2.msra.mxu0 0.0
    %828 = vmatprep.subr.mxu0 0.0
    %829 = vmatpush2.msra.mxu0 0.0
    %830 = vmatprep.subr.mxu0 0.0
    %831 = vmatpush2.msra.mxu0 0.0
    %832 = vmatprep.subr.mxu0 0.0
    %833 = vmatpush2.msra.mxu0 0.0
    %834 = vmatprep.subr.mxu0 0.0
    %835 = vmatpush2.msra.mxu0 0.0
    %836 = vmatprep.subr.mxu0 0.0
    %837 = vmatpush2.msra.mxu0 0.0
    %838 = vmatprep.subr.mxu0 0.0
    %839 = vmatpush2.msra.mxu0 0.0
    %840 = vmatprep.subr.mxu0 0.0
    %841 = vmatpush2.msra.mxu0 0.0
    %842 = vmatprep.subr.mxu0 0.0
    %843 = vmatpush2.msra.mxu0 0.0
    %844 = vmatprep.mubr.f32.mxu0 0.0
    %845 = vmatmul.mubr.f32.gmra.mxu0 %v706
    %v846 = vpop.f32.mrf.mxu0
    %v847 = vadd.f32 0.0, %v846
    %v848 = vpop.f32.mrf.mxu0
    %849 = vdwg.mxu0
    %v851 = vrot.slane %v847, 5
    %v853 = vadd.f32 %v109, %v851
    %v854 = vtanh.pop %v853
    %v856 = vsel %vm38, %v779, 0
    %858 = vmatprep.subr.mxu0 0.0
    %859 = vmatpush1.msra.mxu0 0.0
    %860 = vmatprep.subr.mxu0 0.0
    %861 = vmatpush1.msra.mxu0 0.0
    %862 = vmatprep.subr.mxu0 0.0
    %863 = vmatpush1.msra.mxu0 0.0
    %864 = vmatprep.subr.mxu0 0.0
    %865 = vmatpush1.msra.mxu0 0.0
    %866 = vmatprep.subr.mxu0 0.0
    %867 = vmatpush1.msra.mxu0 0.0
    %868 = vmatprep.subr.mxu0 0.0
    %869 = vmatpush1.msra.mxu0 0.0
    %870 = vmatprep.subr.mxu0 0.0
    %871 = vmatpush1.msra.mxu0 0.0
    %872 = vmatprep.subr.mxu0 0.0
    %873 = vmatpush1.msra.mxu0 0.0
    %874 = vmatprep.subr.mxu0 0.0
    %875 = vmatpush1.msra.mxu0 0.0
    %876 = vmatprep.subr.mxu0 0.0
    %877 = vmatpush1.msra.mxu0 0.0
    %878 = vmatprep.subr.mxu0 0.0
    %879 = vmatpush1.msra.mxu0 0.0
    %880 = vmatprep.subr.mxu0 0.0
    %881 = vmatpush1.msra.mxu0 0.0
    %882 = vmatprep.subr.mxu0 0.0
    %883 = vmatpush1.msra.mxu0 %v31
    %884 = vmatprep.subr.mxu0 0.0
    %885 = vmatpush1.msra.mxu0 %v30
    %886 = vmatprep.subr.mxu0 0.0
    %887 = vmatpush1.msra.mxu0 %v29
    %888 = vmatprep.subr.mxu0 0.0
    %889 = vmatpush1.msra.mxu0 %v28
    %890 = vmatprep.subr.mxu0 0.0
    %891 = vmatpush2.msra.mxu0 0.0
    %892 = vmatprep.subr.mxu0 0.0
    %893 = vmatpush2.msra.mxu0 0.0
    %894 = vmatprep.subr.mxu0 0.0
    %895 = vmatpush2.msra.mxu0 0.0
    %896 = vmatprep.subr.mxu0 0.0
    %897 = vmatpush2.msra.mxu0 0.0
    %898 = vmatprep.subr.mxu0 0.0
    %899 = vmatpush2.msra.mxu0 0.0
    %900 = vmatprep.subr.mxu0 0.0
    %901 = vmatpush2.msra.mxu0 0.0
    %902 = vmatprep.subr.mxu0 0.0
    %903 = vmatpush2.msra.mxu0 0.0
    %904 = vmatprep.subr.mxu0 0.0
    %905 = vmatpush2.msra.mxu0 0.0
    %906 = vmatprep.subr.mxu0 0.0
    %907 = vmatpush2.msra.mxu0 0.0
    %908 = vmatprep.subr.mxu0 0.0
    %909 = vmatpush2.msra.mxu0 0.0
    %910 = vmatprep.subr.mxu0 0.0
    %911 = vmatpush2.msra.mxu0 0.0
    %912 = vmatprep.subr.mxu0 0.0
    %913 = vmatpush2.msra.mxu0 0.0
    %914 = vmatprep.subr.mxu0 0.0
    %915 = vmatpush2.msra.mxu0 0.0
    %916 = vmatprep.subr.mxu0 0.0
    %917 = vmatpush2.msra.mxu0 0.0
    %918 = vmatprep.subr.mxu0 0.0
    %919 = vmatpush2.msra.mxu0 0.0
    %920 = vmatprep.subr.mxu0 0.0
    %921 = vmatpush2.msra.mxu0 0.0
    %922 = vmatprep.mubr.f32.mxu0 0.0
    %923 = vmatmul.mubr.f32.gmra.mxu0 %v856
    %v924 = vpop.f32.mrf.mxu0
    %v925 = vadd.f32 0.0, %v924
    %v926 = vpop.f32.mrf.mxu0
    %927 = vdwg.mxu0
    %v929 = vrot.slane %v854, 3
    %v930 = vsel %vm38, %v929, 0
    %932 = vmatprep.subr.mxu0 0.0
    %933 = vmatpush1.msra.mxu0 0.0
    %934 = vmatprep.subr.mxu0 0.0
    %935 = vmatpush1.msra.mxu0 0.0
    %936 = vmatprep.subr.mxu0 0.0
    %937 = vmatpush1.msra.mxu0 0.0
    %938 = vmatprep.subr.mxu0 0.0
    %939 = vmatpush1.msra.mxu0 0.0
    %940 = vmatprep.subr.mxu0 0.0
    %941 = vmatpush1.msra.mxu0 0.0
    %942 = vmatprep.subr.mxu0 0.0
    %943 = vmatpush1.msra.mxu0 0.0
    %944 = vmatprep.subr.mxu0 0.0
    %945 = vmatpush1.msra.mxu0 0.0
    %946 = vmatprep.subr.mxu0 0.0
    %947 = vmatpush1.msra.mxu0 0.0
    %948 = vmatprep.subr.mxu0 0.0
    %949 = vmatpush1.msra.mxu0 0.0
    %950 = vmatprep.subr.mxu0 0.0
    %951 = vmatpush1.msra.mxu0 0.0
    %952 = vmatprep.subr.mxu0 0.0
    %953 = vmatpush1.msra.mxu0 0.0
    %954 = vmatprep.subr.mxu0 0.0
    %955 = vmatpush1.msra.mxu0 0.0
    %956 = vmatprep.subr.mxu0 0.0
    %957 = vmatpush1.msra.mxu0 %v27
    %958 = vmatprep.subr.mxu0 0.0
    %959 = vmatpush1.msra.mxu0 %v26
    %960 = vmatprep.subr.mxu0 0.0
    %961 = vmatpush1.msra.mxu0 %v25
    %962 = vmatprep.subr.mxu0 0.0
    %963 = vmatpush1.msra.mxu0 %v24
    %964 = vmatprep.subr.mxu0 0.0
    %965 = vmatpush2.msra.mxu0 0.0
    %966 = vmatprep.subr.mxu0 0.0
    %967 = vmatpush2.msra.mxu0 0.0
    %968 = vmatprep.subr.mxu0 0.0
    %969 = vmatpush2.msra.mxu0 0.0
    %970 = vmatprep.subr.mxu0 0.0
    %971 = vmatpush2.msra.mxu0 0.0
    %972 = vmatprep.subr.mxu0 0.0
    %973 = vmatpush2.msra.mxu0 0.0
    %974 = vmatprep.subr.mxu0 0.0
    %975 = vmatpush2.msra.mxu0 0.0
    %976 = vmatprep.subr.mxu0 0.0
    %977 = vmatpush2.msra.mxu0 0.0
    %978 = vmatprep.subr.mxu0 0.0
    %979 = vmatpush2.msra.mxu0 0.0
    %980 = vmatprep.subr.mxu0 0.0
    %981 = vmatpush2.msra.mxu0 0.0
    %982 = vmatprep.subr.mxu0 0.0
    %983 = vmatpush2.msra.mxu0 0.0
    %984 = vmatprep.subr.mxu0 0.0
    %985 = vmatpush2.msra.mxu0 0.0
    %986 = vmatprep.subr.mxu0 0.0
    %987 = vmatpush2.msra.mxu0 0.0
    %988 = vmatprep.subr.mxu0 0.0
    %989 = vmatpush2.msra.mxu0 0.0
    %990 = vmatprep.subr.mxu0 0.0
    %991 = vmatpush2.msra.mxu0 0.0
    %992 = vmatprep.subr.mxu0 0.0
    %993 = vmatpush2.msra.mxu0 0.0
    %994 = vmatprep.subr.mxu0 0.0
    %995 = vmatpush2.msra.mxu0 0.0
    %996 = vmatprep.mubr.f32.mxu0 0.0
    %997 = vmatmul.mubr.f32.gmra.mxu0 %v930
    %v998 = vpop.f32.mrf.mxu0
    %v999 = vadd.f32 %v925, %v998
    %v1000 = vpop.f32.mrf.mxu0
    %1001 = vdwg.mxu0
    %v1002 = vadd.f32 %v999, %v32
    %v1003 = vtanh.pop %v1002
    %1004 = vmatprep.subr.mxu0 0.0
    %1005 = vmatpush1.msra.mxu0 0.0
    %1006 = vmatprep.subr.mxu0 0.0
    %1007 = vmatpush1.msra.mxu0 0.0
    %1008 = vmatprep.subr.mxu0 0.0
    %1009 = vmatpush1.msra.mxu0 0.0
    %1010 = vmatprep.subr.mxu0 0.0
    %1011 = vmatpush1.msra.mxu0 0.0
    %1012 = vmatprep.subr.mxu0 0.0
    %1013 = vmatpush1.msra.mxu0 0.0
    %1014 = vmatprep.subr.mxu0 0.0
    %1015 = vmatpush1.msra.mxu0 0.0
    %1016 = vmatprep.subr.mxu0 0.0
    %1017 = vmatpush1.msra.mxu0 0.0
    %1018 = vmatprep.subr.mxu0 0.0
    %1019 = vmatpush1.msra.mxu0 0.0
    %1020 = vmatprep.subr.mxu0 0.0
    %1021 = vmatpush1.msra.mxu0 0.0
    %1022 = vmatprep.subr.mxu0 0.0
    %1023 = vmatpush1.msra.mxu0 0.0
    %1024 = vmatprep.subr.mxu0 0.0
    %1025 = vmatpush1.msra.mxu0 0.0
    %1026 = vmatprep.subr.mxu0 0.0
    %1027 = vmatpush1.msra.mxu0 0.0
    %1028 = vmatprep.subr.mxu0 0.0
    %1029 = vmatpush1.msra.mxu0 %v22
    %1030 = vmatprep.subr.mxu0 0.0
    %1031 = vmatpush1.msra.mxu0 %v21
    %1032 = vmatprep.subr.mxu0 0.0
    %1033 = vmatpush1.msra.mxu0 %v20
    %1034 = vmatprep.subr.mxu0 0.0
    %1035 = vmatpush1.msra.mxu0 %v19
    %1036 = vmatprep.subr.mxu0 0.0
    %1037 = vmatpush2.msra.mxu0 0.0
    %1038 = vmatprep.subr.mxu0 0.0
    %1039 = vmatpush2.msra.mxu0 0.0
    %1040 = vmatprep.subr.mxu0 0.0
    %1041 = vmatpush2.msra.mxu0 0.0
    %1042 = vmatprep.subr.mxu0 0.0
    %1043 = vmatpush2.msra.mxu0 0.0
    %1044 = vmatprep.subr.mxu0 0.0
    %1045 = vmatpush2.msra.mxu0 0.0
    %1046 = vmatprep.subr.mxu0 0.0
    %1047 = vmatpush2.msra.mxu0 0.0
    %1048 = vmatprep.subr.mxu0 0.0
    %1049 = vmatpush2.msra.mxu0 0.0
    %1050 = vmatprep.subr.mxu0 0.0
    %1051 = vmatpush2.msra.mxu0 0.0
    %1052 = vmatprep.subr.mxu0 0.0
    %1053 = vmatpush2.msra.mxu0 0.0
    %1054 = vmatprep.subr.mxu0 0.0
    %1055 = vmatpush2.msra.mxu0 0.0
    %1056 = vmatprep.subr.mxu0 0.0
    %1057 = vmatpush2.msra.mxu0 0.0
    %1058 = vmatprep.subr.mxu0 0.0
    %1059 = vmatpush2.msra.mxu0 0.0
    %1060 = vmatprep.subr.mxu0 0.0
    %1061 = vmatpush2.msra.mxu0 0.0
    %1062 = vmatprep.subr.mxu0 0.0
    %1063 = vmatpush2.msra.mxu0 0.0
    %1064 = vmatprep.subr.mxu0 0.0
    %1065 = vmatpush2.msra.mxu0 0.0
    %1066 = vmatprep.subr.mxu0 0.0
    %1067 = vmatpush2.msra.mxu0 0.0
    %1068 = vmatprep.mubr.f32.mxu0 0.0
    %1069 = vmatmul.mubr.f32.gmra.mxu0 %v930
    %v1070 = vpop.f32.mrf.mxu0
    %v1071 = vadd.f32 0.0, %v1070
    %v1072 = vpop.f32.mrf.mxu0
    %1073 = vdwg.mxu0
    %v1075 = vrot.slane %v1071, 4
    %v1077 = vadd.f32 %v109, %v1075
    %v1078 = vtanh.pop %v1077
    %v1080 = vsel %vm38, %v1003, 0
    %1082 = vmatprep.subr.mxu0 0.0
    %1083 = vmatpush1.msra.mxu0 0.0
    %1084 = vmatprep.subr.mxu0 0.0
    %1085 = vmatpush1.msra.mxu0 0.0
    %1086 = vmatprep.subr.mxu0 0.0
    %1087 = vmatpush1.msra.mxu0 0.0
    %1088 = vmatprep.subr.mxu0 0.0
    %1089 = vmatpush1.msra.mxu0 0.0
    %1090 = vmatprep.subr.mxu0 0.0
    %1091 = vmatpush1.msra.mxu0 0.0
    %1092 = vmatprep.subr.mxu0 0.0
    %1093 = vmatpush1.msra.mxu0 0.0
    %1094 = vmatprep.subr.mxu0 0.0
    %1095 = vmatpush1.msra.mxu0 0.0
    %1096 = vmatprep.subr.mxu0 0.0
    %1097 = vmatpush1.msra.mxu0 0.0
    %1098 = vmatprep.subr.mxu0 0.0
    %1099 = vmatpush1.msra.mxu0 0.0
    %1100 = vmatprep.subr.mxu0 0.0
    %1101 = vmatpush1.msra.mxu0 0.0
    %1102 = vmatprep.subr.mxu0 0.0
    %1103 = vmatpush1.msra.mxu0 0.0
    %1104 = vmatprep.subr.mxu0 0.0
    %1105 = vmatpush1.msra.mxu0 0.0
    %1106 = vmatprep.subr.mxu0 0.0
    %1107 = vmatpush1.msra.mxu0 %v31
    %1108 = vmatprep.subr.mxu0 0.0
    %1109 = vmatpush1.msra.mxu0 %v30
    %1110 = vmatprep.subr.mxu0 0.0
    %1111 = vmatpush1.msra.mxu0 %v29
    %1112 = vmatprep.subr.mxu0 0.0
    %1113 = vmatpush1.msra.mxu0 %v28
    %1114 = vmatprep.subr.mxu0 0.0
    %1115 = vmatpush2.msra.mxu0 0.0
    %1116 = vmatprep.subr.mxu0 0.0
    %1117 = vmatpush2.msra.mxu0 0.0
    %1118 = vmatprep.subr.mxu0 0.0
    %1119 = vmatpush2.msra.mxu0 0.0
    %1120 = vmatprep.subr.mxu0 0.0
    %1121 = vmatpush2.msra.mxu0 0.0
    %1122 = vmatprep.subr.mxu0 0.0
    %1123 = vmatpush2.msra.mxu0 0.0
    %1124 = vmatprep.subr.mxu0 0.0
    %1125 = vmatpush2.msra.mxu0 0.0
    %1126 = vmatprep.subr.mxu0 0.0
    %1127 = vmatpush2.msra.mxu0 0.0
    %1128 = vmatprep.subr.mxu0 0.0
    %1129 = vmatpush2.msra.mxu0 0.0
    %1130 = vmatprep.subr.mxu0 0.0
    %1131 = vmatpush2.msra.mxu0 0.0
    %1132 = vmatprep.subr.mxu0 0.0
    %1133 = vmatpush2.msra.mxu0 0.0
    %1134 = vmatprep.subr.mxu0 0.0
    %1135 = vmatpush2.msra.mxu0 0.0
    %1136 = vmatprep.subr.mxu0 0.0
    %1137 = vmatpush2.msra.mxu0 0.0
    %1138 = vmatprep.subr.mxu0 0.0
    %1139 = vmatpush2.msra.mxu0 0.0
    %1140 = vmatprep.subr.mxu0 0.0
    %1141 = vmatpush2.msra.mxu0 0.0
    %1142 = vmatprep.subr.mxu0 0.0
    %1143 = vmatpush2.msra.mxu0 0.0
    %1144 = vmatprep.subr.mxu0 0.0
    %1145 = vmatpush2.msra.mxu0 0.0
    %1146 = vmatprep.mubr.f32.mxu0 0.0
    %1147 = vmatmul.mubr.f32.gmra.mxu0 %v1080
    %v1148 = vpop.f32.mrf.mxu0
    %v1149 = vadd.f32 0.0, %v1148
    %v1150 = vpop.f32.mrf.mxu0
    %1151 = vdwg.mxu0
    %v1153 = vrot.slane %v1078, 4
    %v1154 = vsel %vm38, %v1153, 0
    %1156 = vmatprep.subr.mxu0 0.0
    %1157 = vmatpush1.msra.mxu0 0.0
    %1158 = vmatprep.subr.mxu0 0.0
    %1159 = vmatpush1.msra.mxu0 0.0
    %1160 = vmatprep.subr.mxu0 0.0
    %1161 = vmatpush1.msra.mxu0 0.0
    %1162 = vmatprep.subr.mxu0 0.0
    %1163 = vmatpush1.msra.mxu0 0.0
    %1164 = vmatprep.subr.mxu0 0.0
    %1165 = vmatpush1.msra.mxu0 0.0
    %1166 = vmatprep.subr.mxu0 0.0
    %1167 = vmatpush1.msra.mxu0 0.0
    %1168 = vmatprep.subr.mxu0 0.0
    %1169 = vmatpush1.msra.mxu0 0.0
    %1170 = vmatprep.subr.mxu0 0.0
    %1171 = vmatpush1.msra.mxu0 0.0
    %1172 = vmatprep.subr.mxu0 0.0
    %1173 = vmatpush1.msra.mxu0 0.0
    %1174 = vmatprep.subr.mxu0 0.0
    %1175 = vmatpush1.msra.mxu0 0.0
    %1176 = vmatprep.subr.mxu0 0.0
    %1177 = vmatpush1.msra.mxu0 0.0
    %1178 = vmatprep.subr.mxu0 0.0
    %1179 = vmatpush1.msra.mxu0 0.0
    %1180 = vmatprep.subr.mxu0 0.0
    %1181 = vmatpush1.msra.mxu0 %v27
    %1182 = vmatprep.subr.mxu0 0.0
    %1183 = vmatpush1.msra.mxu0 %v26
    %1184 = vmatprep.subr.mxu0 0.0
    %1185 = vmatpush1.msra.mxu0 %v25
    %1186 = vmatprep.subr.mxu0 0.0
    %1187 = vmatpush1.msra.mxu0 %v24
    %1188 = vmatprep.subr.mxu0 0.0
    %1189 = vmatpush2.msra.mxu0 0.0
    %1190 = vmatprep.subr.mxu0 0.0
    %1191 = vmatpush2.msra.mxu0 0.0
    %1192 = vmatprep.subr.mxu0 0.0
    %1193 = vmatpush2.msra.mxu0 0.0
    %1194 = vmatprep.subr.mxu0 0.0
    %1195 = vmatpush2.msra.mxu0 0.0
    %1196 = vmatprep.subr.mxu0 0.0
    %1197 = vmatpush2.msra.mxu0 0.0
    %1198 = vmatprep.subr.mxu0 0.0
    %1199 = vmatpush2.msra.mxu0 0.0
    %1200 = vmatprep.subr.mxu0 0.0
    %1201 = vmatpush2.msra.mxu0 0.0
    %1202 = vmatprep.subr.mxu0 0.0
    %1203 = vmatpush2.msra.mxu0 0.0
    %1204 = vmatprep.subr.mxu0 0.0
    %1205 = vmatpush2.msra.mxu0 0.0
    %1206 = vmatprep.subr.mxu0 0.0
    %1207 = vmatpush2.msra.mxu0 0.0
    %1208 = vmatprep.subr.mxu0 0.0
    %1209 = vmatpush2.msra.mxu0 0.0
    %1210 = vmatprep.subr.mxu0 0.0
    %1211 = vmatpush2.msra.mxu0 0.0
    %1212 = vmatprep.subr.mxu0 0.0
    %1213 = vmatpush2.msra.mxu0 0.0
    %1214 = vmatprep.subr.mxu0 0.0
    %1215 = vmatpush2.msra.mxu0 0.0
    %1216 = vmatprep.subr.mxu0 0.0
    %1217 = vmatpush2.msra.mxu0 0.0
    %1218 = vmatprep.subr.mxu0 0.0
    %1219 = vmatpush2.msra.mxu0 0.0
    %1220 = vmatprep.mubr.f32.mxu0 0.0
    %1221 = vmatmul.mubr.f32.gmra.mxu0 %v1154
    %v1222 = vpop.f32.mrf.mxu0
    %v1223 = vadd.f32 %v1149, %v1222
    %v1224 = vpop.f32.mrf.mxu0
    %1225 = vdwg.mxu0
    %v1226 = vadd.f32 %v1223, %v32
    %v1227 = vtanh.pop %v1226
    %1228 = vmatprep.subr.mxu0 0.0
    %1229 = vmatpush1.msra.mxu0 0.0
    %1230 = vmatprep.subr.mxu0 0.0
    %1231 = vmatpush1.msra.mxu0 0.0
    %1232 = vmatprep.subr.mxu0 0.0
    %1233 = vmatpush1.msra.mxu0 0.0
    %1234 = vmatprep.subr.mxu0 0.0
    %1235 = vmatpush1.msra.mxu0 0.0
    %1236 = vmatprep.subr.mxu0 0.0
    %1237 = vmatpush1.msra.mxu0 0.0
    %1238 = vmatprep.subr.mxu0 0.0
    %1239 = vmatpush1.msra.mxu0 0.0
    %1240 = vmatprep.subr.mxu0 0.0
    %1241 = vmatpush1.msra.mxu0 0.0
    %1242 = vmatprep.subr.mxu0 0.0
    %1243 = vmatpush1.msra.mxu0 0.0
    %1244 = vmatprep.subr.mxu0 0.0
    %1245 = vmatpush1.msra.mxu0 0.0
    %1246 = vmatprep.subr.mxu0 0.0
    %1247 = vmatpush1.msra.mxu0 0.0
    %1248 = vmatprep.subr.mxu0 0.0
    %1249 = vmatpush1.msra.mxu0 0.0
    %1250 = vmatprep.subr.mxu0 0.0
    %1251 = vmatpush1.msra.mxu0 0.0
    %1252 = vmatprep.subr.mxu0 0.0
    %1253 = vmatpush1.msra.mxu0 %v22
    %1254 = vmatprep.subr.mxu0 0.0
    %1255 = vmatpush1.msra.mxu0 %v21
    %1256 = vmatprep.subr.mxu0 0.0
    %1257 = vmatpush1.msra.mxu0 %v20
    %1258 = vmatprep.subr.mxu0 0.0
    %1259 = vmatpush1.msra.mxu0 %v19
    %1260 = vmatprep.subr.mxu0 0.0
    %1261 = vmatpush2.msra.mxu0 0.0
    %1262 = vmatprep.subr.mxu0 0.0
    %1263 = vmatpush2.msra.mxu0 0.0
    %1264 = vmatprep.subr.mxu0 0.0
    %1265 = vmatpush2.msra.mxu0 0.0
    %1266 = vmatprep.subr.mxu0 0.0
    %1267 = vmatpush2.msra.mxu0 0.0
    %1268 = vmatprep.subr.mxu0 0.0
    %1269 = vmatpush2.msra.mxu0 0.0
    %1270 = vmatprep.subr.mxu0 0.0
    %1271 = vmatpush2.msra.mxu0 0.0
    %1272 = vmatprep.subr.mxu0 0.0
    %1273 = vmatpush2.msra.mxu0 0.0
    %1274 = vmatprep.subr.mxu0 0.0
    %1275 = vmatpush2.msra.mxu0 0.0
    %1276 = vmatprep.subr.mxu0 0.0
    %1277 = vmatpush2.msra.mxu0 0.0
    %1278 = vmatprep.subr.mxu0 0.0
    %1279 = vmatpush2.msra.mxu0 0.0
    %1280 = vmatprep.subr.mxu0 0.0
    %1281 = vmatpush2.msra.mxu0 0.0
    %1282 = vmatprep.subr.mxu0 0.0
    %1283 = vmatpush2.msra.mxu0 0.0
    %1284 = vmatprep.subr.mxu0 0.0
    %1285 = vmatpush2.msra.mxu0 0.0
    %1286 = vmatprep.subr.mxu0 0.0
    %1287 = vmatpush2.msra.mxu0 0.0
    %1288 = vmatprep.subr.mxu0 0.0
    %1289 = vmatpush2.msra.mxu0 0.0
    %1290 = vmatprep.subr.mxu0 0.0
    %1291 = vmatpush2.msra.mxu0 0.0
    %1292 = vmatprep.mubr.f32.mxu0 0.0
    %1293 = vmatmul.mubr.f32.gmra.mxu0 %v1154
    %v1294 = vpop.f32.mrf.mxu0
    %v1295 = vadd.f32 0.0, %v1294
    %v1296 = vpop.f32.mrf.mxu0
    %1297 = vdwg.mxu0
    %v1299 = vrot.slane %v1295, 3
    %v1301 = vadd.f32 %v109, %v1299
    %v1302 = vtanh.pop %v1301
    %v1304 = vsel %vm38, %v1227, 0
    %1306 = vmatprep.subr.mxu0 0.0
    %1307 = vmatpush1.msra.mxu0 0.0
    %1308 = vmatprep.subr.mxu0 0.0
    %1309 = vmatpush1.msra.mxu0 0.0
    %1310 = vmatprep.subr.mxu0 0.0
    %1311 = vmatpush1.msra.mxu0 0.0
    %1312 = vmatprep.subr.mxu0 0.0
    %1313 = vmatpush1.msra.mxu0 0.0
    %1314 = vmatprep.subr.mxu0 0.0
    %1315 = vmatpush1.msra.mxu0 0.0
    %1316 = vmatprep.subr.mxu0 0.0
    %1317 = vmatpush1.msra.mxu0 0.0
    %1318 = vmatprep.subr.mxu0 0.0
    %1319 = vmatpush1.msra.mxu0 0.0
    %1320 = vmatprep.subr.mxu0 0.0
    %1321 = vmatpush1.msra.mxu0 0.0
    %1322 = vmatprep.subr.mxu0 0.0
    %1323 = vmatpush1.msra.mxu0 0.0
    %1324 = vmatprep.subr.mxu0 0.0
    %1325 = vmatpush1.msra.mxu0 0.0
    %1326 = vmatprep.subr.mxu0 0.0
    %1327 = vmatpush1.msra.mxu0 0.0
    %1328 = vmatprep.subr.mxu0 0.0
    %1329 = vmatpush1.msra.mxu0 0.0
    %1330 = vmatprep.subr.mxu0 0.0
    %1331 = vmatpush1.msra.mxu0 %v31
    %1332 = vmatprep.subr.mxu0 0.0
    %1333 = vmatpush1.msra.mxu0 %v30
    %1334 = vmatprep.subr.mxu0 0.0
    %1335 = vmatpush1.msra.mxu0 %v29
    %1336 = vmatprep.subr.mxu0 0.0
    %1337 = vmatpush1.msra.mxu0 %v28
    %1338 = vmatprep.subr.mxu0 0.0
    %1339 = vmatpush2.msra.mxu0 0.0
    %1340 = vmatprep.subr.mxu0 0.0
    %1341 = vmatpush2.msra.mxu0 0.0
    %1342 = vmatprep.subr.mxu0 0.0
    %1343 = vmatpush2.msra.mxu0 0.0
    %1344 = vmatprep.subr.mxu0 0.0
    %1345 = vmatpush2.msra.mxu0 0.0
    %1346 = vmatprep.subr.mxu0 0.0
    %1347 = vmatpush2.msra.mxu0 0.0
    %1348 = vmatprep.subr.mxu0 0.0
    %1349 = vmatpush2.msra.mxu0 0.0
    %1350 = vmatprep.subr.mxu0 0.0
    %1351 = vmatpush2.msra.mxu0 0.0
    %1352 = vmatprep.subr.mxu0 0.0
    %1353 = vmatpush2.msra.mxu0 0.0
    %1354 = vmatprep.subr.mxu0 0.0
    %1355 = vmatpush2.msra.mxu0 0.0
    %1356 = vmatprep.subr.mxu0 0.0
    %1357 = vmatpush2.msra.mxu0 0.0
    %1358 = vmatprep.subr.mxu0 0.0
    %1359 = vmatpush2.msra.mxu0 0.0
    %1360 = vmatprep.subr.mxu0 0.0
    %1361 = vmatpush2.msra.mxu0 0.0
    %1362 = vmatprep.subr.mxu0 0.0
    %1363 = vmatpush2.msra.mxu0 0.0
    %1364 = vmatprep.subr.mxu0 0.0
    %1365 = vmatpush2.msra.mxu0 0.0
    %1366 = vmatprep.subr.mxu0 0.0
    %1367 = vmatpush2.msra.mxu0 0.0
    %1368 = vmatprep.subr.mxu0 0.0
    %1369 = vmatpush2.msra.mxu0 0.0
    %1370 = vmatprep.mubr.f32.mxu0 0.0
    %1371 = vmatmul.mubr.f32.gmra.mxu0 %v1304
    %v1372 = vpop.f32.mrf.mxu0
    %v1373 = vadd.f32 0.0, %v1372
    %v1374 = vpop.f32.mrf.mxu0
    %1375 = vdwg.mxu0
    %v1377 = vrot.slane %v1302, 5
    %v1378 = vsel %vm38, %v1377, 0
    %1380 = vmatprep.subr.mxu0 0.0
    %1381 = vmatpush1.msra.mxu0 0.0
    %1382 = vmatprep.subr.mxu0 0.0
    %1383 = vmatpush1.msra.mxu0 0.0
    %1384 = vmatprep.subr.mxu0 0.0
    %1385 = vmatpush1.msra.mxu0 0.0
    %1386 = vmatprep.subr.mxu0 0.0
    %1387 = vmatpush1.msra.mxu0 0.0
    %1388 = vmatprep.subr.mxu0 0.0
    %1389 = vmatpush1.msra.mxu0 0.0
    %1390 = vmatprep.subr.mxu0 0.0
    %1391 = vmatpush1.msra.mxu0 0.0
    %1392 = vmatprep.subr.mxu0 0.0
    %1393 = vmatpush1.msra.mxu0 0.0
    %1394 = vmatprep.subr.mxu0 0.0
    %1395 = vmatpush1.msra.mxu0 0.0
    %1396 = vmatprep.subr.mxu0 0.0
    %1397 = vmatpush1.msra.mxu0 0.0
    %1398 = vmatprep.subr.mxu0 0.0
    %1399 = vmatpush1.msra.mxu0 0.0
    %1400 = vmatprep.subr.mxu0 0.0
    %1401 = vmatpush1.msra.mxu0 0.0
    %1402 = vmatprep.subr.mxu0 0.0
    %1403 = vmatpush1.msra.mxu0 0.0
    %1404 = vmatprep.subr.mxu0 0.0
    %1405 = vmatpush1.msra.mxu0 %v27
    %1406 = vmatprep.subr.mxu0 0.0
    %1407 = vmatpush1.msra.mxu0 %v26
    %1408 = vmatprep.subr.mxu0 0.0
    %1409 = vmatpush1.msra.mxu0 %v25
    %1410 = vmatprep.subr.mxu0 0.0
    %1411 = vmatpush1.msra.mxu0 %v24
    %1412 = vmatprep.subr.mxu0 0.0
    %1413 = vmatpush2.msra.mxu0 0.0
    %1414 = vmatprep.subr.mxu0 0.0
    %1415 = vmatpush2.msra.mxu0 0.0
    %1416 = vmatprep.subr.mxu0 0.0
    %1417 = vmatpush2.msra.mxu0 0.0
    %1418 = vmatprep.subr.mxu0 0.0
    %1419 = vmatpush2.msra.mxu0 0.0
    %1420 = vmatprep.subr.mxu0 0.0
    %1421 = vmatpush2.msra.mxu0 0.0
    %1422 = vmatprep.subr.mxu0 0.0
    %1423 = vmatpush2.msra.mxu0 0.0
    %1424 = vmatprep.subr.mxu0 0.0
    %1425 = vmatpush2.msra.mxu0 0.0
    %1426 = vmatprep.subr.mxu0 0.0
    %1427 = vmatpush2.msra.mxu0 0.0
    %1428 = vmatprep.subr.mxu0 0.0
    %1429 = vmatpush2.msra.mxu0 0.0
    %1430 = vmatprep.subr.mxu0 0.0
    %1431 = vmatpush2.msra.mxu0 0.0
    %1432 = vmatprep.subr.mxu0 0.0
    %1433 = vmatpush2.msra.mxu0 0.0
    %1434 = vmatprep.subr.mxu0 0.0
    %1435 = vmatpush2.msra.mxu0 0.0
    %1436 = vmatprep.subr.mxu0 0.0
    %1437 = vmatpush2.msra.mxu0 0.0
    %1438 = vmatprep.subr.mxu0 0.0
    %1439 = vmatpush2.msra.mxu0 0.0
    %1440 = vmatprep.subr.mxu0 0.0
    %1441 = vmatpush2.msra.mxu0 0.0
    %1442 = vmatprep.subr.mxu0 0.0
    %1443 = vmatpush2.msra.mxu0 0.0
    %1444 = vmatprep.mubr.f32.mxu0 0.0
    %1445 = vmatmul.mubr.f32.gmra.mxu0 %v1378
    %v1446 = vpop.f32.mrf.mxu0
    %v1447 = vadd.f32 %v1373, %v1446
    %v1448 = vpop.f32.mrf.mxu0
    %1449 = vdwg.mxu0
    %v1450 = vadd.f32 %v1447, %v32
    %v1451 = vtanh.pop %v1450
    %1452 = vmatprep.subr.mxu0 0.0
    %1453 = vmatpush1.msra.mxu0 0.0
    %1454 = vmatprep.subr.mxu0 0.0
    %1455 = vmatpush1.msra.mxu0 0.0
    %1456 = vmatprep.subr.mxu0 0.0
    %1457 = vmatpush1.msra.mxu0 0.0
    %1458 = vmatprep.subr.mxu0 0.0
    %1459 = vmatpush1.msra.mxu0 0.0
    %1460 = vmatprep.subr.mxu0 0.0
    %1461 = vmatpush1.msra.mxu0 0.0
    %1462 = vmatprep.subr.mxu0 0.0
    %1463 = vmatpush1.msra.mxu0 0.0
    %1464 = vmatprep.subr.mxu0 0.0
    %1465 = vmatpush1.msra.mxu0 0.0
    %1466 = vmatprep.subr.mxu0 0.0
    %1467 = vmatpush1.msra.mxu0 0.0
    %1468 = vmatprep.subr.mxu0 0.0
    %1469 = vmatpush1.msra.mxu0 0.0
    %1470 = vmatprep.subr.mxu0 0.0
    %1471 = vmatpush1.msra.mxu0 0.0
    %1472 = vmatprep.subr.mxu0 0.0
    %1473 = vmatpush1.msra.mxu0 0.0
    %1474 = vmatprep.subr.mxu0 0.0
    %1475 = vmatpush1.msra.mxu0 0.0
    %1476 = vmatprep.subr.mxu0 0.0
    %1477 = vmatpush1.msra.mxu0 %v22
    %1478 = vmatprep.subr.mxu0 0.0
    %1479 = vmatpush1.msra.mxu0 %v21
    %1480 = vmatprep.subr.mxu0 0.0
    %1481 = vmatpush1.msra.mxu0 %v20
    %1482 = vmatprep.subr.mxu0 0.0
    %1483 = vmatpush1.msra.mxu0 %v19
    %1484 = vmatprep.subr.mxu0 0.0
    %1485 = vmatpush2.msra.mxu0 0.0
    %1486 = vmatprep.subr.mxu0 0.0
    %1487 = vmatpush2.msra.mxu0 0.0
    %1488 = vmatprep.subr.mxu0 0.0
    %1489 = vmatpush2.msra.mxu0 0.0
    %1490 = vmatprep.subr.mxu0 0.0
    %1491 = vmatpush2.msra.mxu0 0.0
    %1492 = vmatprep.subr.mxu0 0.0
    %1493 = vmatpush2.msra.mxu0 0.0
    %1494 = vmatprep.subr.mxu0 0.0
    %1495 = vmatpush2.msra.mxu0 0.0
    %1496 = vmatprep.subr.mxu0 0.0
    %1497 = vmatpush2.msra.mxu0 0.0
    %1498 = vmatprep.subr.mxu0 0.0
    %1499 = vmatpush2.msra.mxu0 0.0
    %1500 = vmatprep.subr.mxu0 0.0
    %1501 = vmatpush2.msra.mxu0 0.0
    %1502 = vmatprep.subr.mxu0 0.0
    %1503 = vmatpush2.msra.mxu0 0.0
    %1504 = vmatprep.subr.mxu0 0.0
    %1505 = vmatpush2.msra.mxu0 0.0
    %1506 = vmatprep.subr.mxu0 0.0
    %1507 = vmatpush2.msra.mxu0 0.0
    %1508 = vmatprep.subr.mxu0 0.0
    %1509 = vmatpush2.msra.mxu0 0.0
    %1510 = vmatprep.subr.mxu0 0.0
    %1511 = vmatpush2.msra.mxu0 0.0
    %1512 = vmatprep.subr.mxu0 0.0
    %1513 = vmatpush2.msra.mxu0 0.0
    %1514 = vmatprep.subr.mxu0 0.0
    %1515 = vmatpush2.msra.mxu0 0.0
    %1516 = vmatprep.mubr.f32.mxu0 0.0
    %1517 = vmatmul.mubr.f32.gmra.mxu0 %v1378
    %v1518 = vpop.f32.mrf.mxu0
    %v1519 = vadd.f32 0.0, %v1518
    %v1520 = vpop.f32.mrf.mxu0
    %1521 = vdwg.mxu0
    %v1523 = vrot.slane %v1519, 2
    %v1525 = vadd.f32 %v109, %v1523
    %v1526 = vtanh.pop %v1525
    %v1528 = vsel %vm38, %v1451, 0
    %1530 = vmatprep.subr.mxu0 0.0
    %1531 = vmatpush1.msra.mxu0 0.0
    %1532 = vmatprep.subr.mxu0 0.0
    %1533 = vmatpush1.msra.mxu0 0.0
    %1534 = vmatprep.subr.mxu0 0.0
    %1535 = vmatpush1.msra.mxu0 0.0
    %1536 = vmatprep.subr.mxu0 0.0
    %1537 = vmatpush1.msra.mxu0 0.0
    %1538 = vmatprep.subr.mxu0 0.0
    %1539 = vmatpush1.msra.mxu0 0.0
    %1540 = vmatprep.subr.mxu0 0.0
    %1541 = vmatpush1.msra.mxu0 0.0
    %1542 = vmatprep.subr.mxu0 0.0
    %1543 = vmatpush1.msra.mxu0 0.0
    %1544 = vmatprep.subr.mxu0 0.0
    %1545 = vmatpush1.msra.mxu0 0.0
    %1546 = vmatprep.subr.mxu0 0.0
    %1547 = vmatpush1.msra.mxu0 0.0
    %1548 = vmatprep.subr.mxu0 0.0
    %1549 = vmatpush1.msra.mxu0 0.0
    %1550 = vmatprep.subr.mxu0 0.0
    %1551 = vmatpush1.msra.mxu0 0.0
    %1552 = vmatprep.subr.mxu0 0.0
    %1553 = vmatpush1.msra.mxu0 0.0
    %1554 = vmatprep.subr.mxu0 0.0
    %1555 = vmatpush1.msra.mxu0 %v31
    %1556 = vmatprep.subr.mxu0 0.0
    %1557 = vmatpush1.msra.mxu0 %v30
    %1558 = vmatprep.subr.mxu0 0.0
    %1559 = vmatpush1.msra.mxu0 %v29
    %1560 = vmatprep.subr.mxu0 0.0
    %1561 = vmatpush1.msra.mxu0 %v28
    %1562 = vmatprep.subr.mxu0 0.0
    %1563 = vmatpush2.msra.mxu0 0.0
    %1564 = vmatprep.subr.mxu0 0.0
    %1565 = vmatpush2.msra.mxu0 0.0
    %1566 = vmatprep.subr.mxu0 0.0
    %1567 = vmatpush2.msra.mxu0 0.0
    %1568 = vmatprep.subr.mxu0 0.0
    %1569 = vmatpush2.msra.mxu0 0.0
    %1570 = vmatprep.subr.mxu0 0.0
    %1571 = vmatpush2.msra.mxu0 0.0
    %1572 = vmatprep.subr.mxu0 0.0
    %1573 = vmatpush2.msra.mxu0 0.0
    %1574 = vmatprep.subr.mxu0 0.0
    %1575 = vmatpush2.msra.mxu0 0.0
    %1576 = vmatprep.subr.mxu0 0.0
    %1577 = vmatpush2.msra.mxu0 0.0
    %1578 = vmatprep.subr.mxu0 0.0
    %1579 = vmatpush2.msra.mxu0 0.0
    %1580 = vmatprep.subr.mxu0 0.0
    %1581 = vmatpush2.msra.mxu0 0.0
    %1582 = vmatprep.subr.mxu0 0.0
    %1583 = vmatpush2.msra.mxu0 0.0
    %1584 = vmatprep.subr.mxu0 0.0
    %1585 = vmatpush2.msra.mxu0 0.0
    %1586 = vmatprep.subr.mxu0 0.0
    %1587 = vmatpush2.msra.mxu0 0.0
    %1588 = vmatprep.subr.mxu0 0.0
    %1589 = vmatpush2.msra.mxu0 0.0
    %1590 = vmatprep.subr.mxu0 0.0
    %1591 = vmatpush2.msra.mxu0 0.0
    %1592 = vmatprep.subr.mxu0 0.0
    %1593 = vmatpush2.msra.mxu0 0.0
    %1594 = vmatprep.mubr.f32.mxu0 0.0
    %1595 = vmatmul.mubr.f32.gmra.mxu0 %v1528
    %v1596 = vpop.f32.mrf.mxu0
    %v1597 = vadd.f32 0.0, %v1596
    %v1598 = vpop.f32.mrf.mxu0
    %1599 = vdwg.mxu0
    %v1601 = vrot.slane %v1526, 6
    %v1602 = vsel %vm38, %v1601, 0
    %1604 = vmatprep.subr.mxu0 0.0
    %1605 = vmatpush1.msra.mxu0 0.0
    %1606 = vmatprep.subr.mxu0 0.0
    %1607 = vmatpush1.msra.mxu0 0.0
    %1608 = vmatprep.subr.mxu0 0.0
    %1609 = vmatpush1.msra.mxu0 0.0
    %1610 = vmatprep.subr.mxu0 0.0
    %1611 = vmatpush1.msra.mxu0 0.0
    %1612 = vmatprep.subr.mxu0 0.0
    %1613 = vmatpush1.msra.mxu0 0.0
    %1614 = vmatprep.subr.mxu0 0.0
    %1615 = vmatpush1.msra.mxu0 0.0
    %1616 = vmatprep.subr.mxu0 0.0
    %1617 = vmatpush1.msra.mxu0 0.0
    %1618 = vmatprep.subr.mxu0 0.0
    %1619 = vmatpush1.msra.mxu0 0.0
    %1620 = vmatprep.subr.mxu0 0.0
    %1621 = vmatpush1.msra.mxu0 0.0
    %1622 = vmatprep.subr.mxu0 0.0
    %1623 = vmatpush1.msra.mxu0 0.0
    %1624 = vmatprep.subr.mxu0 0.0
    %1625 = vmatpush1.msra.mxu0 0.0
    %1626 = vmatprep.subr.mxu0 0.0
    %1627 = vmatpush1.msra.mxu0 0.0
    %1628 = vmatprep.subr.mxu0 0.0
    %1629 = vmatpush1.msra.mxu0 %v27
    %1630 = vmatprep.subr.mxu0 0.0
    %1631 = vmatpush1.msra.mxu0 %v26
    %1632 = vmatprep.subr.mxu0 0.0
    %1633 = vmatpush1.msra.mxu0 %v25
    %1634 = vmatprep.subr.mxu0 0.0
    %1635 = vmatpush1.msra.mxu0 %v24
    %1636 = vmatprep.subr.mxu0 0.0
    %1637 = vmatpush2.msra.mxu0 0.0
    %1638 = vmatprep.subr.mxu0 0.0
    %1639 = vmatpush2.msra.mxu0 0.0
    %1640 = vmatprep.subr.mxu0 0.0
    %1641 = vmatpush2.msra.mxu0 0.0
    %1642 = vmatprep.subr.mxu0 0.0
    %1643 = vmatpush2.msra.mxu0 0.0
    %1644 = vmatprep.subr.mxu0 0.0
    %1645 = vmatpush2.msra.mxu0 0.0
    %1646 = vmatprep.subr.mxu0 0.0
    %1647 = vmatpush2.msra.mxu0 0.0
    %1648 = vmatprep.subr.mxu0 0.0
    %1649 = vmatpush2.msra.mxu0 0.0
    %1650 = vmatprep.subr.mxu0 0.0
    %1651 = vmatpush2.msra.mxu0 0.0
    %1652 = vmatprep.subr.mxu0 0.0
    %1653 = vmatpush2.msra.mxu0 0.0
    %1654 = vmatprep.subr.mxu0 0.0
    %1655 = vmatpush2.msra.mxu0 0.0
    %1656 = vmatprep.subr.mxu0 0.0
    %1657 = vmatpush2.msra.mxu0 0.0
    %1658 = vmatprep.subr.mxu0 0.0
    %1659 = vmatpush2.msra.mxu0 0.0
    %1660 = vmatprep.subr.mxu0 0.0
    %1661 = vmatpush2.msra.mxu0 0.0
    %1662 = vmatprep.subr.mxu0 0.0
    %1663 = vmatpush2.msra.mxu0 0.0
    %1664 = vmatprep.subr.mxu0 0.0
    %1665 = vmatpush2.msra.mxu0 0.0
    %1666 = vmatprep.subr.mxu0 0.0
    %1667 = vmatpush2.msra.mxu0 0.0
    %1668 = vmatprep.mubr.f32.mxu0 0.0
    %1669 = vmatmul.mubr.f32.gmra.mxu0 %v1602
    %v1670 = vpop.f32.mrf.mxu0
    %v1671 = vadd.f32 %v1597, %v1670
    %v1672 = vpop.f32.mrf.mxu0
    %1673 = vdwg.mxu0
    %v1674 = vadd.f32 %v1671, %v32
    %v1675 = vtanh.pop %v1674
    %1676 = vmatprep.subr.mxu0 0.0
    %1677 = vmatpush1.msra.mxu0 0.0
    %1678 = vmatprep.subr.mxu0 0.0
    %1679 = vmatpush1.msra.mxu0 0.0
    %1680 = vmatprep.subr.mxu0 0.0
    %1681 = vmatpush1.msra.mxu0 0.0
    %1682 = vmatprep.subr.mxu0 0.0
    %1683 = vmatpush1.msra.mxu0 0.0
    %1684 = vmatprep.subr.mxu0 0.0
    %1685 = vmatpush1.msra.mxu0 0.0
    %1686 = vmatprep.subr.mxu0 0.0
    %1687 = vmatpush1.msra.mxu0 0.0
    %1688 = vmatprep.subr.mxu0 0.0
    %1689 = vmatpush1.msra.mxu0 0.0
    %1690 = vmatprep.subr.mxu0 0.0
    %1691 = vmatpush1.msra.mxu0 0.0
    %1692 = vmatprep.subr.mxu0 0.0
    %1693 = vmatpush1.msra.mxu0 0.0
    %1694 = vmatprep.subr.mxu0 0.0
    %1695 = vmatpush1.msra.mxu0 0.0
    %1696 = vmatprep.subr.mxu0 0.0
    %1697 = vmatpush1.msra.mxu0 0.0
    %1698 = vmatprep.subr.mxu0 0.0
    %1699 = vmatpush1.msra.mxu0 0.0
    %1700 = vmatprep.subr.mxu0 0.0
    %1701 = vmatpush1.msra.mxu0 %v22
    %1702 = vmatprep.subr.mxu0 0.0
    %1703 = vmatpush1.msra.mxu0 %v21
    %1704 = vmatprep.subr.mxu0 0.0
    %1705 = vmatpush1.msra.mxu0 %v20
    %1706 = vmatprep.subr.mxu0 0.0
    %1707 = vmatpush1.msra.mxu0 %v19
    %1708 = vmatprep.subr.mxu0 0.0
    %1709 = vmatpush2.msra.mxu0 0.0
    %1710 = vmatprep.subr.mxu0 0.0
    %1711 = vmatpush2.msra.mxu0 0.0
    %1712 = vmatprep.subr.mxu0 0.0
    %1713 = vmatpush2.msra.mxu0 0.0
    %1714 = vmatprep.subr.mxu0 0.0
    %1715 = vmatpush2.msra.mxu0 0.0
    %1716 = vmatprep.subr.mxu0 0.0
    %1717 = vmatpush2.msra.mxu0 0.0
    %1718 = vmatprep.subr.mxu0 0.0
    %1719 = vmatpush2.msra.mxu0 0.0
    %1720 = vmatprep.subr.mxu0 0.0
    %1721 = vmatpush2.msra.mxu0 0.0
    %1722 = vmatprep.subr.mxu0 0.0
    %1723 = vmatpush2.msra.mxu0 0.0
    %1724 = vmatprep.subr.mxu0 0.0
    %1725 = vmatpush2.msra.mxu0 0.0
    %1726 = vmatprep.subr.mxu0 0.0
    %1727 = vmatpush2.msra.mxu0 0.0
    %1728 = vmatprep.subr.mxu0 0.0
    %1729 = vmatpush2.msra.mxu0 0.0
    %1730 = vmatprep.subr.mxu0 0.0
    %1731 = vmatpush2.msra.mxu0 0.0
    %1732 = vmatprep.subr.mxu0 0.0
    %1733 = vmatpush2.msra.mxu0 0.0
    %1734 = vmatprep.subr.mxu0 0.0
    %1735 = vmatpush2.msra.mxu0 0.0
    %1736 = vmatprep.subr.mxu0 0.0
    %1737 = vmatpush2.msra.mxu0 0.0
    %1738 = vmatprep.subr.mxu0 0.0
    %1739 = vmatpush2.msra.mxu0 0.0
    %1740 = vmatprep.mubr.f32.mxu0 0.0
    %1741 = vmatmul.mubr.f32.gmra.mxu0 %v1602
    %v1742 = vpop.f32.mrf.mxu0
    %v1743 = vadd.f32 0.0, %v1742
    %v1744 = vpop.f32.mrf.mxu0
    %1745 = vdwg.mxu0
    %v1747 = vrot.slane %v1743, 1
    %v1749 = vadd.f32 %v109, %v1747
    %v1750 = vtanh.pop %v1749
    %v1752 = vsel %vm38, %v1675, 0
    %1754 = vmatprep.subr.mxu0 0.0
    %1755 = vmatpush1.msra.mxu0 0.0
    %1756 = vmatprep.subr.mxu0 0.0
    %1757 = vmatpush1.msra.mxu0 0.0
    %1758 = vmatprep.subr.mxu0 0.0
    %1759 = vmatpush1.msra.mxu0 0.0
    %1760 = vmatprep.subr.mxu0 0.0
    %1761 = vmatpush1.msra.mxu0 0.0
    %1762 = vmatprep.subr.mxu0 0.0
    %1763 = vmatpush1.msra.mxu0 0.0
    %1764 = vmatprep.subr.mxu0 0.0
    %1765 = vmatpush1.msra.mxu0 0.0
    %1766 = vmatprep.subr.mxu0 0.0
    %1767 = vmatpush1.msra.mxu0 0.0
    %1768 = vmatprep.subr.mxu0 0.0
    %1769 = vmatpush1.msra.mxu0 0.0
    %1770 = vmatprep.subr.mxu0 0.0
    %1771 = vmatpush1.msra.mxu0 0.0
    %1772 = vmatprep.subr.mxu0 0.0
    %1773 = vmatpush1.msra.mxu0 0.0
    %1774 = vmatprep.subr.mxu0 0.0
    %1775 = vmatpush1.msra.mxu0 0.0
    %1776 = vmatprep.subr.mxu0 0.0
    %1777 = vmatpush1.msra.mxu0 0.0
    %1778 = vmatprep.subr.mxu0 0.0
    %1779 = vmatpush1.msra.mxu0 %v31
    %1780 = vmatprep.subr.mxu0 0.0
    %1781 = vmatpush1.msra.mxu0 %v30
    %1782 = vmatprep.subr.mxu0 0.0
    %1783 = vmatpush1.msra.mxu0 %v29
    %1784 = vmatprep.subr.mxu0 0.0
    %1785 = vmatpush1.msra.mxu0 %v28
    %1786 = vmatprep.subr.mxu0 0.0
    %1787 = vmatpush2.msra.mxu0 0.0
    %1788 = vmatprep.subr.mxu0 0.0
    %1789 = vmatpush2.msra.mxu0 0.0
    %1790 = vmatprep.subr.mxu0 0.0
    %1791 = vmatpush2.msra.mxu0 0.0
    %1792 = vmatprep.subr.mxu0 0.0
    %1793 = vmatpush2.msra.mxu0 0.0
    %1794 = vmatprep.subr.mxu0 0.0
    %1795 = vmatpush2.msra.mxu0 0.0
    %1796 = vmatprep.subr.mxu0 0.0
    %1797 = vmatpush2.msra.mxu0 0.0
    %1798 = vmatprep.subr.mxu0 0.0
    %1799 = vmatpush2.msra.mxu0 0.0
    %1800 = vmatprep.subr.mxu0 0.0
    %1801 = vmatpush2.msra.mxu0 0.0
    %1802 = vmatprep.subr.mxu0 0.0
    %1803 = vmatpush2.msra.mxu0 0.0
    %1804 = vmatprep.subr.mxu0 0.0
    %1805 = vmatpush2.msra.mxu0 0.0
    %1806 = vmatprep.subr.mxu0 0.0
    %1807 = vmatpush2.msra.mxu0 0.0
    %1808 = vmatprep.subr.mxu0 0.0
    %1809 = vmatpush2.msra.mxu0 0.0
    %1810 = vmatprep.subr.mxu0 0.0
    %1811 = vmatpush2.msra.mxu0 0.0
    %1812 = vmatprep.subr.mxu0 0.0
    %1813 = vmatpush2.msra.mxu0 0.0
    %1814 = vmatprep.subr.mxu0 0.0
    %1815 = vmatpush2.msra.mxu0 0.0
    %1816 = vmatprep.subr.mxu0 0.0
    %1817 = vmatpush2.msra.mxu0 0.0
    %1818 = vmatprep.mubr.f32.mxu0 0.0
    %1819 = vmatmul.mubr.f32.gmra.mxu0 %v1752
    %v1820 = vpop.f32.mrf.mxu0
    %v1821 = vadd.f32 0.0, %v1820
    %v1822 = vpop.f32.mrf.mxu0
    %1823 = vdwg.mxu0
    %v1825 = vrot.slane %v1750, 7
    %v1826 = vsel %vm38, %v1825, 0
    %1828 = vmatprep.subr.mxu0 0.0
    %1829 = vmatpush1.msra.mxu0 0.0
    %1830 = vmatprep.subr.mxu0 0.0
    %1831 = vmatpush1.msra.mxu0 0.0
    %1832 = vmatprep.subr.mxu0 0.0
    %1833 = vmatpush1.msra.mxu0 0.0
    %1834 = vmatprep.subr.mxu0 0.0
    %1835 = vmatpush1.msra.mxu0 0.0
    %1836 = vmatprep.subr.mxu0 0.0
    %1837 = vmatpush1.msra.mxu0 0.0
    %1838 = vmatprep.subr.mxu0 0.0
    %1839 = vmatpush1.msra.mxu0 0.0
    %1840 = vmatprep.subr.mxu0 0.0
    %1841 = vmatpush1.msra.mxu0 0.0
    %1842 = vmatprep.subr.mxu0 0.0
    %1843 = vmatpush1.msra.mxu0 0.0
    %1844 = vmatprep.subr.mxu0 0.0
    %1845 = vmatpush1.msra.mxu0 0.0
    %1846 = vmatprep.subr.mxu0 0.0
    %1847 = vmatpush1.msra.mxu0 0.0
    %1848 = vmatprep.subr.mxu0 0.0
    %1849 = vmatpush1.msra.mxu0 0.0
    %1850 = vmatprep.subr.mxu0 0.0
    %1851 = vmatpush1.msra.mxu0 0.0
    %1852 = vmatprep.subr.mxu0 0.0
    %1853 = vmatpush1.msra.mxu0 %v27
    %1854 = vmatprep.subr.mxu0 0.0
    %1855 = vmatpush1.msra.mxu0 %v26
    %1856 = vmatprep.subr.mxu0 0.0
    %1857 = vmatpush1.msra.mxu0 %v25
    %1858 = vmatprep.subr.mxu0 0.0
    %1859 = vmatpush1.msra.mxu0 %v24
    %1860 = vmatprep.subr.mxu0 0.0
    %1861 = vmatpush2.msra.mxu0 0.0
    %1862 = vmatprep.subr.mxu0 0.0
    %1863 = vmatpush2.msra.mxu0 0.0
    %1864 = vmatprep.subr.mxu0 0.0
    %1865 = vmatpush2.msra.mxu0 0.0
    %1866 = vmatprep.subr.mxu0 0.0
    %1867 = vmatpush2.msra.mxu0 0.0
    %1868 = vmatprep.subr.mxu0 0.0
    %1869 = vmatpush2.msra.mxu0 0.0
    %1870 = vmatprep.subr.mxu0 0.0
    %1871 = vmatpush2.msra.mxu0 0.0
    %1872 = vmatprep.subr.mxu0 0.0
    %1873 = vmatpush2.msra.mxu0 0.0
    %1874 = vmatprep.subr.mxu0 0.0
    %1875 = vmatpush2.msra.mxu0 0.0
    %1876 = vmatprep.subr.mxu0 0.0
    %1877 = vmatpush2.msra.mxu0 0.0
    %1878 = vmatprep.subr.mxu0 0.0
    %1879 = vmatpush2.msra.mxu0 0.0
    %1880 = vmatprep.subr.mxu0 0.0
    %1881 = vmatpush2.msra.mxu0 0.0
    %1882 = vmatprep.subr.mxu0 0.0
    %1883 = vmatpush2.msra.mxu0 0.0
    %1884 = vmatprep.subr.mxu0 0.0
    %1885 = vmatpush2.msra.mxu0 0.0
    %1886 = vmatprep.subr.mxu0 0.0
    %1887 = vmatpush2.msra.mxu0 0.0
    %1888 = vmatprep.subr.mxu0 0.0
    %1889 = vmatpush2.msra.mxu0 0.0
    %1890 = vmatprep.subr.mxu0 0.0
    %1891 = vmatpush2.msra.mxu0 0.0
    %1892 = vmatprep.mubr.f32.mxu0 0.0
    %1893 = vmatmul.mubr.f32.gmra.mxu0 %v1826
    %v1894 = vpop.f32.mrf.mxu0
    %v1895 = vadd.f32 %v1821, %v1894
    %v1896 = vpop.f32.mrf.mxu0
    %1897 = vdwg.mxu0
    %v1898 = vadd.f32 %v1895, %v32
    %v1899 = vtanh.pop %v1898
    %v1900 = vld [vmem:[%s2] sm:$0xff]
    %v1901 = vld [vmem:[%s2 + $0x8] sm:$0xff]
    %v1902 = vld [vmem:[%s2 + $0x10] sm:$0xff]
    %v1903 = vld [vmem:[%s2 + $0x18] sm:$0xff]
    %v1904 = vld [vmem:[%s2 + $0x20] sm:$0x1]
    %v1906 = vsel %vm38, %v1899, 0
    %1908 = vmatprep.subr.mxu0 0.0
    %1909 = vmatpush1.msra.mxu0 0.0
    %1910 = vmatprep.subr.mxu0 0.0
    %1911 = vmatpush1.msra.mxu0 0.0
    %1912 = vmatprep.subr.mxu0 0.0
    %1913 = vmatpush1.msra.mxu0 0.0
    %1914 = vmatprep.subr.mxu0 0.0
    %1915 = vmatpush1.msra.mxu0 0.0
    %1916 = vmatprep.subr.mxu0 0.0
    %1917 = vmatpush1.msra.mxu0 0.0
    %1918 = vmatprep.subr.mxu0 0.0
    %1919 = vmatpush1.msra.mxu0 0.0
    %1920 = vmatprep.subr.mxu0 0.0
    %1921 = vmatpush1.msra.mxu0 0.0
    %1922 = vmatprep.subr.mxu0 0.0
    %1923 = vmatpush1.msra.mxu0 0.0
    %1924 = vmatprep.subr.mxu0 0.0
    %1925 = vmatpush1.msra.mxu0 0.0
    %1926 = vmatprep.subr.mxu0 0.0
    %1927 = vmatpush1.msra.mxu0 0.0
    %1928 = vmatprep.subr.mxu0 0.0
    %1929 = vmatpush1.msra.mxu0 0.0
    %1930 = vmatprep.subr.mxu0 0.0
    %1931 = vmatpush1.msra.mxu0 0.0
    %1932 = vmatprep.subr.mxu0 0.0
    %1933 = vmatpush1.msra.mxu0 %v1903
    %1934 = vmatprep.subr.mxu0 0.0
    %1935 = vmatpush1.msra.mxu0 %v1902
    %1936 = vmatprep.subr.mxu0 0.0
    %1937 = vmatpush1.msra.mxu0 %v1901
    %1938 = vmatprep.subr.mxu0 0.0
    %1939 = vmatpush1.msra.mxu0 %v1900
    %1940 = vmatprep.subr.mxu0 0.0
    %1941 = vmatpush2.msra.mxu0 0.0
    %1942 = vmatprep.subr.mxu0 0.0
    %1943 = vmatpush2.msra.mxu0 0.0
    %1944 = vmatprep.subr.mxu0 0.0
    %1945 = vmatpush2.msra.mxu0 0.0
    %1946 = vmatprep.subr.mxu0 0.0
    %1947 = vmatpush2.msra.mxu0 0.0
    %1948 = vmatprep.subr.mxu0 0.0
    %1949 = vmatpush2.msra.mxu0 0.0
    %1950 = vmatprep.subr.mxu0 0.0
    %1951 = vmatpush2.msra.mxu0 0.0
    %1952 = vmatprep.subr.mxu0 0.0
    %1953 = vmatpush2.msra.mxu0 0.0
    %1954 = vmatprep.subr.mxu0 0.0
    %1955 = vmatpush2.msra.mxu0 0.0
    %1956 = vmatprep.subr.mxu0 0.0
    %1957 = vmatpush2.msra.mxu0 0.0
    %1958 = vmatprep.subr.mxu0 0.0
    %1959 = vmatpush2.msra.mxu0 0.0
    %1960 = vmatprep.subr.mxu0 0.0
    %1961 = vmatpush2.msra.mxu0 0.0
    %1962 = vmatprep.subr.mxu0 0.0
    %1963 = vmatpush2.msra.mxu0 0.0
    %1964 = vmatprep.subr.mxu0 0.0
    %1965 = vmatpush2.msra.mxu0 0.0
    %1966 = vmatprep.subr.mxu0 0.0
    %1967 = vmatpush2.msra.mxu0 0.0
    %1968 = vmatprep.subr.mxu0 0.0
    %1969 = vmatpush2.msra.mxu0 0.0
    %1970 = vmatprep.subr.mxu0 0.0
    %1971 = vmatpush2.msra.mxu0 0.0
    %1972 = vmatprep.mubr.f32.mxu0 0.0
    %1973 = vmatmul.mubr.f32.gmra.mxu0 %v1906
    %v1974 = vpop.f32.mrf.mxu0
    %v1975 = vadd.f32 %v1904, %v1974
    %v1976 = vpop.f32.mrf.mxu0
    %1977 = vdwg.mxu0
    %vm1978 = vcmask 57344
    %v1979 = vsel %vm1978, %v1975, -inf
    %1980 = vmax.xlane.f32.xlu0 %v1979
    %v1981 = vpop.xlane.xlu0 %1980
    %v1982 = vsub.f32 %v1975, %v1981
    %v1983 = vmul.f32 %v1982, 1.442695
    %v1984 = vpow.pop %v1983
    %v1985 = vsel %vm1978, %v1984, 0.0
    %1986 = vadd.xlane.f32.xlu0 %v1985
    %v1987 = vpop.xlane.xlu0 %1986
    %v1988 = vlog2.pop %v1987
    %v1989 = vmul.f32 %v1988, 0.6931472
    %v1990 = vsub.f32 %v1982, %v1989
    %1991 = vst.msk [vmem:[#allocation2] sm:$0x1] %vm1978, %v1990
    // Predicated region
    $region14: #{tpu_custom_call.1} parent=1 // pred_check
      _
    $region15: #{tpu_custom_call.1} parent=1 // pred_check_branch
      %1993 = sbr.rel (0) target = $region17
    $region16: #{tpu_custom_call.1} parent=1 // pred_region
      %s1995 = ssub.s32 16, 16
      %1996 = vsyncadd [#allocation3], %s1995
      %s1998 = sshll.u32 [#allocation2], 4
      %s1999 = int_to_ptr.vmem [resolvable:$true] %s1998
      %2001 = dma.vmem_to_hbm [thread:$0]  %s1999, 16, %s3, [#allocation3]
    $region17: #{tpu_custom_call.1} parent=1 // pred_fallthru
      _
    // Predicated region
    $region18: #{tpu_custom_call.1} parent=1 // pred_check
      _
    $region19: #{tpu_custom_call.1} parent=1 // pred_check_branch
      %2003 = sbr.rel (0) target = $region21
    $region20: #{tpu_custom_call.1} parent=1 // pred_region
      %2004 = dma.done [#allocation3], 16
    $region21: #{tpu_custom_call.1} parent=1 // pred_fallthru
      _
    %2005 = vsyncpa [#allocation3], 1

</llo_original>
